<compile_context>
chip_gen: v6e
topology: v6e:2x2x1
jax: 0.10.0
libtpu: 0.0.40
codegen_flags: <defaults>
</compile_context>

<pallas_src>
from functools import partial

import jax
import jax.numpy as jnp
from jax.experimental import pallas as pl
from jax.experimental.pallas import tpu as pltpu


# ----------------------------------------------------------------------------
# Fused kernel: conv1(+ReLU) -> conv2(+ReLU) -> GAP+Linear, one batch item/step
# ----------------------------------------------------------------------------
def _fused_extractor_kernel(W, p1_ref, w1_ref, b1_ref, w2_ref, b2_ref,
                            w3_ref, b3_ref, mask_ref,
                            f1_ref, f2_ref, cls_ref):
    # p1_ref : (1, 9*Cin, HW)  transposed im2col patches of the input
    # w1_ref : (C1, 9*Cin)     conv1 weight (im2col layout, transposed)
    # w2_ref : (9, C2, C1)     conv2 weight, one (C2, C1) matrix per tap
    # w3_ref : (D, C2)         classifier weight (transposed, 1/HW folded in)
    # b*_ref : (C*, 1)         biases as columns (broadcast over HW lanes)
    # mask_ref: (9, 1, HW)     per-tap validity masks (zero-padding borders)
    # f1_ref : (1, C1, HW)     conv1 feature map (channels-first, lane-dense)
    # f2_ref : (1, C2, HW)     conv2 feature map (channels-first, lane-dense)
    # cls_ref: (1, D, 1)       classifier output column
    _, C1, HW = f1_ref.shape
    C2 = f2_ref.shape[1]

    # ---- conv1 + ReLU: a single MXU matmul, contraction K = 9*Cin ----------
    a1 = jnp.dot(w1_ref[...], p1_ref[0],
                 preferred_element_type=jnp.float32) + b1_ref[...]
    a1 = jnp.maximum(a1, 0.0)                           # (C1, HW)
    f1_ref[0] = a1

    # ---- conv2 + ReLU: 9 lane-rolled taps of the VMEM-resident activation --
    acc = jnp.zeros((C2, HW), jnp.float32) + b2_ref[...]
    for kh in range(3):
        for kw in range(3):
            t = kh * 3 + kw
            off = (kh - 1) * W + (kw - 1)               # flattened HW offset
            if off == 0:
                tap = a1                                # center tap, no mask
            else:
                tap = pltpu.roll(a1, (-off) % HW, axis=1) * mask_ref[t]
            acc = acc + jnp.dot(w2_ref[t], tap,
                                preferred_element_type=jnp.float32)
    a2 = jnp.maximum(acc, 0.0)                          # (C2, HW)
    f2_ref[0] = a2

    # ---- GAP + Linear (1/HW folded into w3 in the wrapper) ------------------
    pooled = jnp.sum(a2, axis=1, keepdims=True)         # (C2, 1) lane reduce
    cls = jnp.dot(w3_ref[...], pooled,
                  preferred_element_type=jnp.float32) + b3_ref[...]
    cls_ref[0] = cls.astype(cls_ref.dtype)              # (D, 1)


def _im2col_3x3_t(x_nchw):
    """(N,Cin,H,W) -> (N, 9*Cin, H*W) transposed patches (3x3 / pad=1)."""
    N, C, H, W = x_nchw.shape
    xp = jnp.pad(x_nchw, ((0, 0), (0, 0), (1, 1), (1, 1)))
    taps = [xp[:, :, kh:kh + H, kw:kw + W].reshape(N, C, H * W)
            for kh in range(3) for kw in range(3)]
    return jnp.concatenate(taps, axis=1)                # row = tap*Cin + cin


def _conv3x3_tap_masks(H, W):
    """(9, 1, H*W) float masks: 1 where tap (dh,dw) reads inside the image."""
    hw = jnp.arange(H * W)
    h, w = hw // W, hw % W
    masks = []
    for dh in (-1, 0, 1):
        for dw in (-1, 0, 1):
            valid = ((h + dh >= 0) & (h + dh < H) &
                     (w + dw >= 0) & (w + dw < W))
            masks.append(valid.astype(jnp.float32))
    return jnp.stack(masks).reshape(9, 1, H * W)


@jax.jit
def _fused_forward(x_nchw, w1, b1, w2, b2, w3, b3):
    """Runs the whole (tiny) network in ONE Pallas kernel.

    Returns (conv1 NCHW, conv2 NCHW, classifier (N, D))."""
    N, Cin, H, W = x_nchw.shape
    C1 = w1.shape[-1]
    C2 = w2.shape[-1]
    D = w3.shape[-1]
    HW = H * W

    p1 = _im2col_3x3_t(x_nchw)                           # (N, 9*Cin, HW)
    w1t = w1.reshape(9 * Cin, C1).T                      # (C1, 9*Cin)
    w2t = jnp.transpose(w2.reshape(9, C1, C2), (0, 2, 1))  # (9, C2, C1)
    w3t = (w3 * (1.0 / HW)).T                            # (D, C2), GAP folded
    b1c = b1.reshape(C1, 1)
    b2c = b2.reshape(C2, 1)
    b3c = b3.reshape(D, 1)
    masks = _conv3x3_tap_masks(H, W)                     # (9, 1, HW)

    f1, f2, cls = pl.pallas_call(
        partial(_fused_extractor_kernel, W),
        out_shape=(jax.ShapeDtypeStruct((N, C1, HW), jnp.float32),
                   jax.ShapeDtypeStruct((N, C2, HW), jnp.float32),
                   jax.ShapeDtypeStruct((N, D, 1), jnp.float32)),
        grid_spec=pltpu.PrefetchScalarGridSpec(
            num_scalar_prefetch=0,
            grid=(N,),
            in_specs=[
                pl.BlockSpec((1, 9 * Cin, HW), lambda n: (n, 0, 0)),
                pl.BlockSpec((C1, 9 * Cin), lambda n: (0, 0)),
                pl.BlockSpec((C1, 1), lambda n: (0, 0)),
                pl.BlockSpec((9, C2, C1), lambda n: (0, 0, 0)),
                pl.BlockSpec((C2, 1), lambda n: (0, 0)),
                pl.BlockSpec((D, C2), lambda n: (0, 0)),
                pl.BlockSpec((D, 1), lambda n: (0, 0)),
                pl.BlockSpec((9, 1, HW), lambda n: (0, 0, 0)),
            ],
            out_specs=[
                pl.BlockSpec((1, C1, HW), lambda n: (n, 0, 0)),
                pl.BlockSpec((1, C2, HW), lambda n: (n, 0, 0)),
                pl.BlockSpec((1, D, 1), lambda n: (n, 0, 0)),
            ],
        ),
        compiler_params=pltpu.CompilerParams(
            dimension_semantics=("parallel",)),
    )(p1, w1t, b1c, w2t, b2c, w3t, b3c, masks)

    # (N, C, HW) -> (N, C, H, W) is a pure reshape: already NCHW, no transpose.
    return f1.reshape(N, C1, H, W), f2.reshape(N, C2, H, W), cls[:, :, 0]


# ----------------------------------------------------------------------------
# Sequential feature extractor (faithful port of the PyTorch forward logic)
# ----------------------------------------------------------------------------
class SequentialFeatureExtractorPallas:
    """Faithful port of SequentialFeatureExtractorAbstractClass."""

    def __init__(self, all_feat_names, feature_blocks):
        assert isinstance(feature_blocks, list)
        assert isinstance(all_feat_names, list)
        assert len(all_feat_names) == len(feature_blocks)
        self.all_feat_names = all_feat_names
        self._feature_blocks = feature_blocks

    def _parse_out_keys_arg(self, out_feat_keys):
        out_feat_keys = ([self.all_feat_names[-1]]
                         if out_feat_keys is None else out_feat_keys)
        if len(out_feat_keys) == 0:
            raise ValueError('Empty list of output feature keys.')
        for f, key in enumerate(out_feat_keys):
            if key not in self.all_feat_names:
                raise ValueError(
                    'Feature with name {0} does not exist. '
                    'Existing features: {1}.'.format(key, self.all_feat_names))
            elif key in out_feat_keys[:f]:
                raise ValueError('Duplicate output feature key: {0}.'.format(key))
        max_out_feat = max(self.all_feat_names.index(key) for key in out_feat_keys)
        return out_feat_keys, max_out_feat

    def forward(self, x, out_feat_keys=None):
        # Generic sequential path (used when blocks are plain callables).
        out_feat_keys, max_out_feat = self._parse_out_keys_arg(out_feat_keys)
        out_feats = [None] * len(out_feat_keys)
        feat = x
        for f in range(max_out_feat + 1):
            feat = self._feature_blocks[f](feat)
            key = self.all_feat_names[f]
            if key in out_feat_keys:
                out_feats[out_feat_keys.index(key)] = feat
        return out_feats[0] if len(out_feats) == 1 else out_feats

    __call__ = forward


class FusedConvNetExtractor(SequentialFeatureExtractorPallas):
    """Concrete extractor: conv1 -> conv2 -> GAP+Linear.

    All three feature blocks execute inside ONE fused Pallas TPU kernel
    (intermediate activations never touch HBM).  The observable forward()
    semantics — key validation, output ordering, single-vs-list return and
    NCHW conv feature maps — match the PyTorch module exactly.
    """

    def __init__(self, w1, b1, w2, b2, w3, b3):
        all_feat_names = ["conv1", "conv2", "classifier"]
        # Block descriptors keep the sequential interface of the abstract
        # class; the fused forward below executes them jointly in one kernel.
        feature_blocks = [("conv3x3_relu", (w1, b1)),
                          ("conv3x3_relu", (w2, b2)),
                          ("gap_linear", (w3, b3))]
        super().__init__(all_feat_names, feature_blocks)
        self._params = (w1, b1, w2, b2, w3, b3)

    def forward(self, x, out_feat_keys=None):
        out_feat_keys, _ = self._parse_out_keys_arg(out_feat_keys)
        # The whole (tiny) network runs in a single fused kernel; requested
        # features are selected afterwards and are identical to block-by-block
        # execution.  Conv features come back already in NCHW.
        f1, f2, cls = _fused_forward(x, *self._params)
        feats = {"conv1": f1, "conv2": f2, "classifier": cls}
        out_feats = [feats[key] for key in out_feat_keys]
        return out_feats[0] if len(out_feats) == 1 else out_feats

    __call__ = forward


# ----------------------------------------------------------------------------
# Pure-JAX reference (for correctness checking only)
# ----------------------------------------------------------------------------
def _reference_forward(x_nchw, w1, b1, w2, b2, w3, b3):
    x = jnp.transpose(x_nchw, (0, 2, 3, 1))

    def conv(x, w, b):
        N, H, W, C = x.shape
        xp = jnp.pad(x, ((0, 0), (1, 1), (1, 1), (0, 0)))
        taps = [xp[:, kh:kh + H, kw:kw + W, :]
                for kh in range(3) for kw in range(3)]
        p = jnp.concatenate(taps, axis=-1).reshape(N, H * W, 9 * C)
        y = jnp.einsum('npk,ko->npo', p, w.reshape(9 * C, -1)) + b
        return jnp.maximum(y, 0.0).reshape(N, H, W, -1)

    f1 = conv(x, w1, b1)
    f2 = conv(f1, w2, b2)
    cls = f2.mean(axis=(1, 2)) @ w3 + b3
    return (jnp.transpose(f1, (0, 3, 1, 2)),
            jnp.transpose(f2, (0, 3, 1, 2)), cls)


if __name__ == "__main__":
    key = jax.random.PRNGKey(0)
    kx, k1, k2, k3, k4, k5, k6 = jax.random.split(key, 7)

    # conv1: 4 -> 8, conv2: 8 -> 16, classifier: 16 -> 32
    w1 = 0.1 * jax.random.normal(k1, (3, 3, 4, 8), jnp.float32)
    b1 = 0.01 * jax.random.normal(k2, (8,), jnp.float32)
    w2 = 0.1 * jax.random.normal(k3, (3, 3, 8, 16), jnp.float32)
    b2 = 0.01 * jax.random.normal(k4, (16,), jnp.float32)
    w3 = 0.1 * jax.random.normal(k5, (16, 32), jnp.float32)
    b3 = 0.01 * jax.random.normal(k6, (32,), jnp.float32)

    x = jax.random.normal(kx, (2, 4, 16, 16), jnp.float32)   # NCHW input

    # --- correctness vs. pure-JAX reference ---------------------------------
    kf1, kf2, kcls = _fused_forward(x, w1, b1, w2, b2, w3, b3)
    kf1, kf2, kcls = map(jax.block_until_ready, (kf1, kf2, kcls))
    rf1, rf2, rcls = _reference_forward(x, w1, b1, w2, b2, w3, b3)
    assert bool(jnp.allclose(kf1, rf1, rtol=1e-4, atol=1e-4))
    assert bool(jnp.allclose(kf2, rf2, rtol=1e-4, atol=1e-4))
    assert bool(jnp.allclose(kcls, rcls, rtol=1e-4, atol=1e-4))

    # --- module-level semantics ---------------------------------------------
    extractor = FusedConvNetExtractor(w1, b1, w2, b2, w3, b3)

    # Default: last feature only ("classifier") -> (2, 32)
    last_feat = jax.block_until_ready(extractor(x))
    assert last_feat.shape == (2, 32)

    # Multiple requested features -> list in requested order (conv in NCHW).
    feats = extractor(x, out_feat_keys=["conv1", "classifier"])
    feats = [jax.block_until_ready(f) for f in feats]
    assert feats[0].shape == (2, 8, 16, 16)
    assert feats[1].shape == (2, 32)
    assert bool(jnp.allclose(feats[0], rf1, rtol=1e-4, atol=1e-4))

    print("KERNEL_OK")
</pallas_src>

<mosaic_0001>
module attributes {stable_mosaic.version = 11 : i64} {
  func.func @_fused_extractor_kernel(%arg0: i32, %arg1: memref<1x36x256xf32, #tpu.memory_space<vmem>>, %arg2: memref<8x36xf32, #tpu.memory_space<vmem>>, %arg3: memref<8x1xf32, #tpu.memory_space<vmem>>, %arg4: memref<9x16x8xf32, #tpu.memory_space<vmem>>, %arg5: memref<16x1xf32, #tpu.memory_space<vmem>>, %arg6: memref<32x16xf32, #tpu.memory_space<vmem>>, %arg7: memref<32x1xf32, #tpu.memory_space<vmem>>, %arg8: memref<9x1x256xf32, #tpu.memory_space<vmem>>, %arg9: memref<1x8x256xf32, #tpu.memory_space<vmem>>, %arg10: memref<1x16x256xf32, #tpu.memory_space<vmem>>, %arg11: memref<1x32x1xf32, #tpu.memory_space<vmem>>) attributes {dimension_semantics = [#tpu.dimension_semantics<parallel>], iteration_bounds = array<i64: 2>, scalar_prefetch = 0 : i64, scratch_operands = 0 : i64, tpu.core_type = #tpu.core_type<tc>, window_params = [{transform_indices = @transform_0, window_bounds = array<i64: 1, 36, 256>}, {pipeline_mode = #tpu.pipeline_mode<synchronous>, transform_indices = @transform_1, window_bounds = array<i64: 8, 36>}, {pipeline_mode = #tpu.pipeline_mode<synchronous>, transform_indices = @transform_2, window_bounds = array<i64: 8, 1>}, {pipeline_mode = #tpu.pipeline_mode<synchronous>, transform_indices = @transform_3, window_bounds = array<i64: 9, 16, 8>}, {pipeline_mode = #tpu.pipeline_mode<synchronous>, transform_indices = @transform_4, window_bounds = array<i64: 16, 1>}, {pipeline_mode = #tpu.pipeline_mode<synchronous>, transform_indices = @transform_5, window_bounds = array<i64: 32, 16>}, {pipeline_mode = #tpu.pipeline_mode<synchronous>, transform_indices = @transform_6, window_bounds = array<i64: 32, 1>}, {pipeline_mode = #tpu.pipeline_mode<synchronous>, transform_indices = @transform_7, window_bounds = array<i64: 9, 1, 256>}, {transform_indices = @transform_8, window_bounds = array<i64: 1, 8, 256>}, {transform_indices = @transform_9, window_bounds = array<i64: 1, 16, 256>}, {transform_indices = @transform_10, window_bounds = array<i64: 1, 32, 1>}]} {
    %c0 = arith.constant 0 : index
    %c0_0 = arith.constant 0 : index
    %0 = vector.load %arg2[%c0, %c0_0] : memref<8x36xf32, #tpu.memory_space<vmem>>, vector<8x36xf32>
    %c0_1 = arith.constant 0 : index
    %c0_2 = arith.constant 0 : index
    %c0_3 = arith.constant 0 : index
    %1 = vector.load %arg1[%c0_1, %c0_2, %c0_3] : memref<1x36x256xf32, #tpu.memory_space<vmem>>, vector<1x36x256xf32>
    %2 = vector.shape_cast %1 : vector<1x36x256xf32> to vector<36x256xf32>
    %cst = arith.constant dense<0.000000e+00> : vector<8x256xf32>
    %3 = tpu.matmul %0, %2, %cst {dimension_numbers = #tpu.dot_dimension_numbers<[1], [0], [0], [1], [0, 0, 1, 1], [], []>} : vector<8x36xf32>, vector<36x256xf32>, vector<8x256xf32> -> vector<8x256xf32>
    %c0_4 = arith.constant 0 : index
    %c0_5 = arith.constant 0 : index
    %4 = vector.load %arg3[%c0_4, %c0_5] : memref<8x1xf32, #tpu.memory_space<vmem>>, vector<8x1xf32>
    %5 = vector.broadcast %4 : vector<8x1xf32> to vector<8x256xf32>
    %6 = arith.addf %3, %5 : vector<8x256xf32>
    %cst_6 = arith.constant 0.000000e+00 : f32
    %7 = vector.broadcast %cst_6 : f32 to vector<8x256xf32>
    %8 = arith.maximumf %6, %7 : vector<8x256xf32>
    %c0_7 = arith.constant 0 : index
    %c0_8 = arith.constant 0 : index
    %c0_9 = arith.constant 0 : index
    %9 = vector.load %arg9[%c0_7, %c0_8, %c0_9] : memref<1x8x256xf32, #tpu.memory_space<vmem>>, vector<1x8x256xf32>
    %10 = vector.shape_cast %9 : vector<1x8x256xf32> to vector<8x256xf32>
    %11 = vector.shape_cast %8 : vector<8x256xf32> to vector<1x8x256xf32>
    tpu.vector_store %arg9[%c0_7, %c0_8, %c0_9], %11 {strides = array<i32>} : memref<1x8x256xf32, #tpu.memory_space<vmem>>, vector<1x8x256xf32>,
    %cst_10 = arith.constant 0.000000e+00 : f32
    %12 = vector.broadcast %cst_10 : f32 to vector<16x256xf32>
    %c0_11 = arith.constant 0 : index
    %c0_12 = arith.constant 0 : index
    %13 = vector.load %arg5[%c0_11, %c0_12] : memref<16x1xf32, #tpu.memory_space<vmem>>, vector<16x1xf32>
    %14 = vector.broadcast %13 : vector<16x1xf32> to vector<16x256xf32>
    %15 = arith.addf %12, %14 : vector<16x256xf32>
    %c17_i32 = arith.constant 17 : i32
    %16 = tpu.dynamic_rotate %8 by %c17_i32 dim 1 : vector<8x256xf32>, i32 -> vector<8x256xf32>
    %c0_13 = arith.constant 0 : index
    %c0_14 = arith.constant 0 : index
    %c0_15 = arith.constant 0 : index
    %17 = vector.load %arg8[%c0_13, %c0_14, %c0_15] : memref<9x1x256xf32, #tpu.memory_space<vmem>>, vector<1x1x256xf32>
    %18 = vector.shape_cast %17 : vector<1x1x256xf32> to vector<1x256xf32>
    %19 = vector.broadcast %18 : vector<1x256xf32> to vector<8x256xf32>
    %20 = arith.mulf %16, %19 : vector<8x256xf32>
    %c0_16 = arith.constant 0 : index
    %c0_17 = arith.constant 0 : index
    %c0_18 = arith.constant 0 : index
    %21 = vector.load %arg4[%c0_16, %c0_17, %c0_18] : memref<9x16x8xf32, #tpu.memory_space<vmem>>, vector<1x16x8xf32>
    %22 = vector.shape_cast %21 : vector<1x16x8xf32> to vector<16x8xf32>
    %cst_19 = arith.constant dense<0.000000e+00> : vector<16x256xf32>
    %23 = tpu.matmul %22, %20, %cst_19 {dimension_numbers = #tpu.dot_dimension_numbers<[1], [0], [0], [1], [0, 0, 1, 1], [], []>} : vector<16x8xf32>, vector<8x256xf32>, vector<16x256xf32> -> vector<16x256xf32>
    %24 = arith.addf %15, %23 : vector<16x256xf32>
    %c16_i32 = arith.constant 16 : i32
    %25 = tpu.dynamic_rotate %8 by %c16_i32 dim 1 : vector<8x256xf32>, i32 -> vector<8x256xf32>
    %c1 = arith.constant 1 : index
    %c0_20 = arith.constant 0 : index
    %c0_21 = arith.constant 0 : index
    %26 = vector.load %arg8[%c1, %c0_20, %c0_21] : memref<9x1x256xf32, #tpu.memory_space<vmem>>, vector<1x1x256xf32>
    %27 = vector.shape_cast %26 : vector<1x1x256xf32> to vector<1x256xf32>
    %28 = vector.broadcast %27 : vector<1x256xf32> to vector<8x256xf32>
    %29 = arith.mulf %25, %28 : vector<8x256xf32>
    %c1_22 = arith.constant 1 : index
    %c0_23 = arith.constant 0 : index
    %c0_24 = arith.constant 0 : index
    %30 = vector.load %arg4[%c1_22, %c0_23, %c0_24] : memref<9x16x8xf32, #tpu.memory_space<vmem>>, vector<1x16x8xf32>
    %31 = vector.shape_cast %30 : vector<1x16x8xf32> to vector<16x8xf32>
    %cst_25 = arith.constant dense<0.000000e+00> : vector<16x256xf32>
    %32 = tpu.matmul %31, %29, %cst_25 {dimension_numbers = #tpu.dot_dimension_numbers<[1], [0], [0], [1], [0, 0, 1, 1], [], []>} : vector<16x8xf32>, vector<8x256xf32>, vector<16x256xf32> -> vector<16x256xf32>
    %33 = arith.addf %24, %32 : vector<16x256xf32>
    %c15_i32 = arith.constant 15 : i32
    %34 = tpu.dynamic_rotate %8 by %c15_i32 dim 1 : vector<8x256xf32>, i32 -> vector<8x256xf32>
    %c2 = arith.constant 2 : index
    %c0_26 = arith.constant 0 : index
    %c0_27 = arith.constant 0 : index
    %35 = vector.load %arg8[%c2, %c0_26, %c0_27] : memref<9x1x256xf32, #tpu.memory_space<vmem>>, vector<1x1x256xf32>
    %36 = vector.shape_cast %35 : vector<1x1x256xf32> to vector<1x256xf32>
    %37 = vector.broadcast %36 : vector<1x256xf32> to vector<8x256xf32>
    %38 = arith.mulf %34, %37 : vector<8x256xf32>
    %c2_28 = arith.constant 2 : index
    %c0_29 = arith.constant 0 : index
    %c0_30 = arith.constant 0 : index
    %39 = vector.load %arg4[%c2_28, %c0_29, %c0_30] : memref<9x16x8xf32, #tpu.memory_space<vmem>>, vector<1x16x8xf32>
    %40 = vector.shape_cast %39 : vector<1x16x8xf32> to vector<16x8xf32>
    %cst_31 = arith.constant dense<0.000000e+00> : vector<16x256xf32>
    %41 = tpu.matmul %40, %38, %cst_31 {dimension_numbers = #tpu.dot_dimension_numbers<[1], [0], [0], [1], [0, 0, 1, 1], [], []>} : vector<16x8xf32>, vector<8x256xf32>, vector<16x256xf32> -> vector<16x256xf32>
    %42 = arith.addf %33, %41 : vector<16x256xf32>
    %c1_i32 = arith.constant 1 : i32
    %43 = tpu.dynamic_rotate %8 by %c1_i32 dim 1 : vector<8x256xf32>, i32 -> vector<8x256xf32>
    %c3 = arith.constant 3 : index
    %c0_32 = arith.constant 0 : index
    %c0_33 = arith.constant 0 : index
    %44 = vector.load %arg8[%c3, %c0_32, %c0_33] : memref<9x1x256xf32, #tpu.memory_space<vmem>>, vector<1x1x256xf32>
    %45 = vector.shape_cast %44 : vector<1x1x256xf32> to vector<1x256xf32>
    %46 = vector.broadcast %45 : vector<1x256xf32> to vector<8x256xf32>
    %47 = arith.mulf %43, %46 : vector<8x256xf32>
    %c3_34 = arith.constant 3 : index
    %c0_35 = arith.constant 0 : index
    %c0_36 = arith.constant 0 : index
    %48 = vector.load %arg4[%c3_34, %c0_35, %c0_36] : memref<9x16x8xf32, #tpu.memory_space<vmem>>, vector<1x16x8xf32>
    %49 = vector.shape_cast %48 : vector<1x16x8xf32> to vector<16x8xf32>
    %cst_37 = arith.constant dense<0.000000e+00> : vector<16x256xf32>
    %50 = tpu.matmul %49, %47, %cst_37 {dimension_numbers = #tpu.dot_dimension_numbers<[1], [0], [0], [1], [0, 0, 1, 1], [], []>} : vector<16x8xf32>, vector<8x256xf32>, vector<16x256xf32> -> vector<16x256xf32>
    %51 = arith.addf %42, %50 : vector<16x256xf32>
    %c4 = arith.constant 4 : index
    %c0_38 = arith.constant 0 : index
    %c0_39 = arith.constant 0 : index
    %52 = vector.load %arg4[%c4, %c0_38, %c0_39] : memref<9x16x8xf32, #tpu.memory_space<vmem>>, vector<1x16x8xf32>
    %53 = vector.shape_cast %52 : vector<1x16x8xf32> to vector<16x8xf32>
    %cst_40 = arith.constant dense<0.000000e+00> : vector<16x256xf32>
    %54 = tpu.matmul %53, %8, %cst_40 {dimension_numbers = #tpu.dot_dimension_numbers<[1], [0], [0], [1], [0, 0, 1, 1], [], []>} : vector<16x8xf32>, vector<8x256xf32>, vector<16x256xf32> -> vector<16x256xf32>
    %55 = arith.addf %51, %54 : vector<16x256xf32>
    %c255_i32 = arith.constant 255 : i32
    %56 = tpu.dynamic_rotate %8 by %c255_i32 dim 1 : vector<8x256xf32>, i32 -> vector<8x256xf32>
    %c5 = arith.constant 5 : index
    %c0_41 = arith.constant 0 : index
    %c0_42 = arith.constant 0 : index
    %57 = vector.load %arg8[%c5, %c0_41, %c0_42] : memref<9x1x256xf32, #tpu.memory_space<vmem>>, vector<1x1x256xf32>
    %58 = vector.shape_cast %57 : vector<1x1x256xf32> to vector<1x256xf32>
    %59 = vector.broadcast %58 : vector<1x256xf32> to vector<8x256xf32>
    %60 = arith.mulf %56, %59 : vector<8x256xf32>
    %c5_43 = arith.constant 5 : index
    %c0_44 = arith.constant 0 : index
    %c0_45 = arith.constant 0 : index
    %61 = vector.load %arg4[%c5_43, %c0_44, %c0_45] : memref<9x16x8xf32, #tpu.memory_space<vmem>>, vector<1x16x8xf32>
    %62 = vector.shape_cast %61 : vector<1x16x8xf32> to vector<16x8xf32>
    %cst_46 = arith.constant dense<0.000000e+00> : vector<16x256xf32>
    %63 = tpu.matmul %62, %60, %cst_46 {dimension_numbers = #tpu.dot_dimension_numbers<[1], [0], [0], [1], [0, 0, 1, 1], [], []>} : vector<16x8xf32>, vector<8x256xf32>, vector<16x256xf32> -> vector<16x256xf32>
    %64 = arith.addf %55, %63 : vector<16x256xf32>
    %c241_i32 = arith.constant 241 : i32
    %65 = tpu.dynamic_rotate %8 by %c241_i32 dim 1 : vector<8x256xf32>, i32 -> vector<8x256xf32>
    %c6 = arith.constant 6 : index
    %c0_47 = arith.constant 0 : index
    %c0_48 = arith.constant 0 : index
    %66 = vector.load %arg8[%c6, %c0_47, %c0_48] : memref<9x1x256xf32, #tpu.memory_space<vmem>>, vector<1x1x256xf32>
    %67 = vector.shape_cast %66 : vector<1x1x256xf32> to vector<1x256xf32>
    %68 = vector.broadcast %67 : vector<1x256xf32> to vector<8x256xf32>
    %69 = arith.mulf %65, %68 : vector<8x256xf32>
    %c6_49 = arith.constant 6 : index
    %c0_50 = arith.constant 0 : index
    %c0_51 = arith.constant 0 : index
    %70 = vector.load %arg4[%c6_49, %c0_50, %c0_51] : memref<9x16x8xf32, #tpu.memory_space<vmem>>, vector<1x16x8xf32>
    %71 = vector.shape_cast %70 : vector<1x16x8xf32> to vector<16x8xf32>
    %cst_52 = arith.constant dense<0.000000e+00> : vector<16x256xf32>
    %72 = tpu.matmul %71, %69, %cst_52 {dimension_numbers = #tpu.dot_dimension_numbers<[1], [0], [0], [1], [0, 0, 1, 1], [], []>} : vector<16x8xf32>, vector<8x256xf32>, vector<16x256xf32> -> vector<16x256xf32>
    %73 = arith.addf %64, %72 : vector<16x256xf32>
    %c240_i32 = arith.constant 240 : i32
    %74 = tpu.dynamic_rotate %8 by %c240_i32 dim 1 : vector<8x256xf32>, i32 -> vector<8x256xf32>
    %c7 = arith.constant 7 : index
    %c0_53 = arith.constant 0 : index
    %c0_54 = arith.constant 0 : index
    %75 = vector.load %arg8[%c7, %c0_53, %c0_54] : memref<9x1x256xf32, #tpu.memory_space<vmem>>, vector<1x1x256xf32>
    %76 = vector.shape_cast %75 : vector<1x1x256xf32> to vector<1x256xf32>
    %77 = vector.broadcast %76 : vector<1x256xf32> to vector<8x256xf32>
    %78 = arith.mulf %74, %77 : vector<8x256xf32>
    %c7_55 = arith.constant 7 : index
    %c0_56 = arith.constant 0 : index
    %c0_57 = arith.constant 0 : index
    %79 = vector.load %arg4[%c7_55, %c0_56, %c0_57] : memref<9x16x8xf32, #tpu.memory_space<vmem>>, vector<1x16x8xf32>
    %80 = vector.shape_cast %79 : vector<1x16x8xf32> to vector<16x8xf32>
    %cst_58 = arith.constant dense<0.000000e+00> : vector<16x256xf32>
    %81 = tpu.matmul %80, %78, %cst_58 {dimension_numbers = #tpu.dot_dimension_numbers<[1], [0], [0], [1], [0, 0, 1, 1], [], []>} : vector<16x8xf32>, vector<8x256xf32>, vector<16x256xf32> -> vector<16x256xf32>
    %82 = arith.addf %73, %81 : vector<16x256xf32>
    %c239_i32 = arith.constant 239 : i32
    %83 = tpu.dynamic_rotate %8 by %c239_i32 dim 1 : vector<8x256xf32>, i32 -> vector<8x256xf32>
    %c8 = arith.constant 8 : index
    %c0_59 = arith.constant 0 : index
    %c0_60 = arith.constant 0 : index
    %84 = vector.load %arg8[%c8, %c0_59, %c0_60] : memref<9x1x256xf32, #tpu.memory_space<vmem>>, vector<1x1x256xf32>
    %85 = vector.shape_cast %84 : vector<1x1x256xf32> to vector<1x256xf32>
    %86 = vector.broadcast %85 : vector<1x256xf32> to vector<8x256xf32>
    %87 = arith.mulf %83, %86 : vector<8x256xf32>
    %c8_61 = arith.constant 8 : index
    %c0_62 = arith.constant 0 : index
    %c0_63 = arith.constant 0 : index
    %88 = vector.load %arg4[%c8_61, %c0_62, %c0_63] : memref<9x16x8xf32, #tpu.memory_space<vmem>>, vector<1x16x8xf32>
    %89 = vector.shape_cast %88 : vector<1x16x8xf32> to vector<16x8xf32>
    %cst_64 = arith.constant dense<0.000000e+00> : vector<16x256xf32>
    %90 = tpu.matmul %89, %87, %cst_64 {dimension_numbers = #tpu.dot_dimension_numbers<[1], [0], [0], [1], [0, 0, 1, 1], [], []>} : vector<16x8xf32>, vector<8x256xf32>, vector<16x256xf32> -> vector<16x256xf32>
    %91 = arith.addf %82, %90 : vector<16x256xf32>
    %cst_65 = arith.constant 0.000000e+00 : f32
    %92 = vector.broadcast %cst_65 : f32 to vector<16x256xf32>
    %93 = arith.maximumf %91, %92 : vector<16x256xf32>
    %c0_66 = arith.constant 0 : index
    %c0_67 = arith.constant 0 : index
    %c0_68 = arith.constant 0 : index
    %94 = vector.load %arg10[%c0_66, %c0_67, %c0_68] : memref<1x16x256xf32, #tpu.memory_space<vmem>>, vector<1x16x256xf32>
    %95 = vector.shape_cast %94 : vector<1x16x256xf32> to vector<16x256xf32>
    %96 = vector.shape_cast %93 : vector<16x256xf32> to vector<1x16x256xf32>
    tpu.vector_store %arg10[%c0_66, %c0_67, %c0_68], %96 {strides = array<i32>} : memref<1x16x256xf32, #tpu.memory_space<vmem>>, vector<1x16x256xf32>,
    %cst_69 = arith.constant dense<0.000000e+00> : vector<16xf32>
    %97 = vector.multi_reduction <add>, %93, %cst_69 [1] : vector<16x256xf32> to vector<16xf32>
    %98 = vector.shape_cast %97 : vector<16xf32> to vector<16x1xf32>
    %c0_70 = arith.constant 0 : index
    %c0_71 = arith.constant 0 : index
    %99 = vector.load %arg6[%c0_70, %c0_71] : memref<32x16xf32, #tpu.memory_space<vmem>>, vector<32x16xf32>
    %cst_72 = arith.constant dense<0.000000e+00> : vector<32x1xf32>
    %100 = tpu.matmul %99, %98, %cst_72 {dimension_numbers = #tpu.dot_dimension_numbers<[1], [0], [0], [1], [0, 0, 1, 1], [], []>} : vector<32x16xf32>, vector<16x1xf32>, vector<32x1xf32> -> vector<32x1xf32>
    %c0_73 = arith.constant 0 : index
    %c0_74 = arith.constant 0 : index
    %101 = vector.load %arg7[%c0_73, %c0_74] : memref<32x1xf32, #tpu.memory_space<vmem>>, vector<32x1xf32>
    %102 = arith.addf %100, %101 : vector<32x1xf32>
    %c0_75 = arith.constant 0 : index
    %c0_76 = arith.constant 0 : index
    %c0_77 = arith.constant 0 : index
    %103 = vector.load %arg11[%c0_75, %c0_76, %c0_77] : memref<1x32x1xf32, #tpu.memory_space<vmem>>, vector<1x32x1xf32>
    %104 = vector.shape_cast %103 : vector<1x32x1xf32> to vector<32x1xf32>
    %105 = vector.shape_cast %102 : vector<32x1xf32> to vector<1x32x1xf32>
    tpu.vector_store %arg11[%c0_75, %c0_76, %c0_77], %105 {strides = array<i32>} : memref<1x32x1xf32, #tpu.memory_space<vmem>>, vector<1x32x1xf32>,
    return
  }
  func.func @transform_0(%arg0: i32) -> (i32, i32, i32) {
    %c0_i32 = arith.constant 0 : i32
    %c0_i32_0 = arith.constant 0 : i32
    %c0_i32_1 = arith.constant 0 : i32
    return %arg0, %c0_i32, %c0_i32_0 : i32, i32, i32
  }
  func.func @transform_1(%arg0: i32) -> (i32, i32) {
    %c0_i32 = arith.constant 0 : i32
    %c0_i32_0 = arith.constant 0 : i32
    %c0_i32_1 = arith.constant 0 : i32
    return %c0_i32, %c0_i32_0 : i32, i32
  }
  func.func @transform_2(%arg0: i32) -> (i32, i32) {
    %c0_i32 = arith.constant 0 : i32
    %c0_i32_0 = arith.constant 0 : i32
    %c0_i32_1 = arith.constant 0 : i32
    return %c0_i32, %c0_i32_0 : i32, i32
  }
  func.func @transform_3(%arg0: i32) -> (i32, i32, i32) {
    %c0_i32 = arith.constant 0 : i32
    %c0_i32_0 = arith.constant 0 : i32
    %c0_i32_1 = arith.constant 0 : i32
    %c0_i32_2 = arith.constant 0 : i32
    return %c0_i32, %c0_i32_0, %c0_i32_1 : i32, i32, i32
  }
  func.func @transform_4(%arg0: i32) -> (i32, i32) {
    %c0_i32 = arith.constant 0 : i32
    %c0_i32_0 = arith.constant 0 : i32
    %c0_i32_1 = arith.constant 0 : i32
    return %c0_i32, %c0_i32_0 : i32, i32
  }
  func.func @transform_5(%arg0: i32) -> (i32, i32) {
    %c0_i32 = arith.constant 0 : i32
    %c0_i32_0 = arith.constant 0 : i32
    %c0_i32_1 = arith.constant 0 : i32
    return %c0_i32, %c0_i32_0 : i32, i32
  }
  func.func @transform_6(%arg0: i32) -> (i32, i32) {
    %c0_i32 = arith.constant 0 : i32
    %c0_i32_0 = arith.constant 0 : i32
    %c0_i32_1 = arith.constant 0 : i32
    return %c0_i32, %c0_i32_0 : i32, i32
  }
  func.func @transform_7(%arg0: i32) -> (i32, i32, i32) {
    %c0_i32 = arith.constant 0 : i32
    %c0_i32_0 = arith.constant 0 : i32
    %c0_i32_1 = arith.constant 0 : i32
    %c0_i32_2 = arith.constant 0 : i32
    return %c0_i32, %c0_i32_0, %c0_i32_1 : i32, i32, i32
  }
  func.func @transform_8(%arg0: i32) -> (i32, i32, i32) {
    %c0_i32 = arith.constant 0 : i32
    %c0_i32_0 = arith.constant 0 : i32
    %c0_i32_1 = arith.constant 0 : i32
    return %arg0, %c0_i32, %c0_i32_0 : i32, i32, i32
  }
  func.func @transform_9(%arg0: i32) -> (i32, i32, i32) {
    %c0_i32 = arith.constant 0 : i32
    %c0_i32_0 = arith.constant 0 : i32
    %c0_i32_1 = arith.constant 0 : i32
    return %arg0, %c0_i32, %c0_i32_0 : i32, i32, i32
  }
  func.func @transform_10(%arg0: i32) -> (i32, i32, i32) {
    %c0_i32 = arith.constant 0 : i32
    %c0_i32_0 = arith.constant 0 : i32
    %c0_i32_1 = arith.constant 0 : i32
    return %arg0, %c0_i32, %c0_i32_0 : i32, i32, i32
  }
}

</mosaic_0001>

<llo_original>
// kernel: _fused_forward.1
$region0: #{_fused_forward.1}
  #allocation0 [shape = 'u32[]', space=smem, size = 0x4, offset = 0x4, fixed_abs, tag = 'smem constant byte address 0x4 - core index']
  #allocation1 [shape = 'u32[144,128]{1,0:T(1,128)}', space=vmem, size = 0x12000, scoped, tag = 'internal scratch']
  %s0 = inlined_call_operand.vmem [shape: f32[2,36,256], index: 0, kind: input, shape index: {}]
  %s1 = inlined_call_operand.vmem [shape: f32[8,36], index: 1, kind: input, shape index: {}]
  %s2 = inlined_call_operand.vmem [shape: f32[8,1], index: 2, kind: input, shape index: {}]
  %s3 = inlined_call_operand.vmem [shape: f32[9,16,8], index: 3, kind: input, shape index: {}]
  %s4 = inlined_call_operand.vmem [shape: f32[16,1], index: 4, kind: input, shape index: {}]
  %s5 = inlined_call_operand.vmem [shape: f32[32,16], index: 5, kind: input, shape index: {}]
  %s6 = inlined_call_operand.vmem [shape: f32[32,1], index: 6, kind: input, shape index: {}]
  %s7 = inlined_call_operand.vmem [shape: f32[9,1,256], index: 7, kind: input, shape index: {}]
  %s8 = inlined_call_operand.vmem [shape: f32[2,8,256], index: 8, kind: output, shape index: {0}]
  %s9 = inlined_call_operand.vmem [shape: f32[2,16,256], index: 9, kind: output, shape index: {1}]
  %s10 = inlined_call_operand.vmem [shape: f32[2,32,1], index: 10, kind: output, shape index: {2}]
  %11 = xla_tuple %s8, %s9, %s10
  %s12 = sld [smem:[#allocation0]]
  $region81: #{_fused_forward.1} parent=0
    _
  %s14 = ssub.s32 1, %s12
  %s15 = scalar_select 0, %s14, %s12
  loop: start=0, step=1, limit=4
  $region2: #{_fused_forward.1} parent=0 // loop_pre_header
    _
  $region3: #{_fused_forward.1} parent=0 // loop_header
    %s17 = sphi 0, %s21
    %p18 = scmp.ge.s32.totalorder %s17, 4
    %s27 = sphi 0, %s29
    %s30 = sphi 0, %s27
    %s31 = sphi 0, %s30
    %s47 = sphi 0, %s31
    %s51 = sphi 0, %s51
    %s53 = sphi 0, %s51
    %s54 = sphi 0, %s53
    %s68 = sphi 0, %s54
    %s72 = sphi 0, %s72
    %s74 = sphi 0, %s72
    %s75 = sphi 0, %s74
    %s89 = sphi 0, %s75
    %s93 = sphi 0, %s93
    %s95 = sphi 0, %s93
    %s96 = sphi 0, %s95
    %s110 = sphi 0, %s96
    %s114 = sphi 0, %s114
    %s116 = sphi 0, %s114
    %s117 = sphi 0, %s116
    %s131 = sphi 0, %s117
    %s135 = sphi 0, %s135
    %s137 = sphi 0, %s135
    %s138 = sphi 0, %s137
    %s152 = sphi 0, %s138
    %s156 = sphi 0, %s156
    %s158 = sphi 0, %s156
    %s159 = sphi 0, %s158
    %s173 = sphi 0, %s159
    %s177 = sphi 0, %s177
    %s179 = sphi 0, %s177
    %s180 = sphi 0, %s179
    %s194 = sphi 0, %s180
    %s200 = sphi 0, %s202
    %s203 = sphi 0, %s200
    %s204 = sphi 0, %s203
    %s220 = sphi 0, %s204
    %s226 = sphi 0, %s228
    %s229 = sphi 0, %s226
    %s230 = sphi 0, %s229
    %s246 = sphi 0, %s230
    %s252 = sphi 0, %s254
    %s255 = sphi 0, %s252
    %s256 = sphi 0, %s255
    %s272 = sphi 0, %s256
  $region4: #{_fused_forward.1} parent=0 // loop_header_branch
    %20 = sbr.rel (%p18) target = $region8
  $region5: #{_fused_forward.1} parent=0 // loop_body
    %s22 = ssub.s32 %s17, 1
    %s23 = ssub.s32 %s17, 2
    %s24 = sadd.s32 %s17, 1
    %s25 = ssub.s32 %s17, %s24
    %p26 = scmp.eq.s32.totalorder %s25, 0
    %s28 = sadd.s32 %s27, 1
    %s29 = scalar_select %p26, %s27, %s28
    %p32 = pneg %p26
    %p33 = scmp.eq.s32.totalorder %s17, 1
    %p34 = por %p32, %p33
    %p35 = scmp.ne.s32.totalorder %s27, %s30
    %p36 = scmp.eq.s32.totalorder %s17, 0
    %p37 = por %p35, %p36
    %p38 = scmp.ne.s32.totalorder %s27, %s30
    %p39 = scmp.eq.s32.totalorder %s22, 1
    %p40 = por %p38, %p39
    %p41 = scmp.ne.s32.totalorder %s30, %s31
    %p42 = scmp.eq.s32.totalorder %s22, 0
    %p43 = por %p41, %p42
    %p44 = scmp.ne.s32.totalorder %s30, %s31
    %p45 = scmp.eq.s32.totalorder %s23, 1
    %p46 = por %p44, %p45
    %p48 = scmp.ne.s32.totalorder %s31, %s47
    %p49 = scmp.eq.s32.totalorder %s23, 0
    %p50 = por %p48, %p49
    %s52 = sadd.s32 %s51, 1
    %p55 = scmp.eq.s32.totalorder %s17, 1
    %p56 = scmp.ne.s32.totalorder %s51, %s53
    %p57 = scmp.eq.s32.totalorder %s17, 0
    %p58 = por %p56, %p57
    %p59 = scmp.ne.s32.totalorder %s51, %s53
    %p60 = scmp.eq.s32.totalorder %s22, 1
    %p61 = por %p59, %p60
    %p62 = scmp.ne.s32.totalorder %s53, %s54
    %p63 = scmp.eq.s32.totalorder %s22, 0
    %p64 = por %p62, %p63
    %p65 = scmp.ne.s32.totalorder %s53, %s54
    %p66 = scmp.eq.s32.totalorder %s23, 1
    %p67 = por %p65, %p66
    %p69 = scmp.ne.s32.totalorder %s54, %s68
    %p70 = scmp.eq.s32.totalorder %s23, 0
    %p71 = por %p69, %p70
    %s73 = sadd.s32 %s72, 1
    %p76 = scmp.eq.s32.totalorder %s17, 1
    %p77 = scmp.ne.s32.totalorder %s72, %s74
    %p78 = scmp.eq.s32.totalorder %s17, 0
    %p79 = por %p77, %p78
    %p80 = scmp.ne.s32.totalorder %s72, %s74
    %p81 = scmp.eq.s32.totalorder %s22, 1
    %p82 = por %p80, %p81
    %p83 = scmp.ne.s32.totalorder %s74, %s75
    %p84 = scmp.eq.s32.totalorder %s22, 0
    %p85 = por %p83, %p84
    %p86 = scmp.ne.s32.totalorder %s74, %s75
    %p87 = scmp.eq.s32.totalorder %s23, 1
    %p88 = por %p86, %p87
    %p90 = scmp.ne.s32.totalorder %s75, %s89
    %p91 = scmp.eq.s32.totalorder %s23, 0
    %p92 = por %p90, %p91
    %s94 = sadd.s32 %s93, 1
    %p97 = scmp.eq.s32.totalorder %s17, 1
    %p98 = scmp.ne.s32.totalorder %s93, %s95
    %p99 = scmp.eq.s32.totalorder %s17, 0
    %p100 = por %p98, %p99
    %p101 = scmp.ne.s32.totalorder %s93, %s95
    %p102 = scmp.eq.s32.totalorder %s22, 1
    %p103 = por %p101, %p102
    %p104 = scmp.ne.s32.totalorder %s95, %s96
    %p105 = scmp.eq.s32.totalorder %s22, 0
    %p106 = por %p104, %p105
    %p107 = scmp.ne.s32.totalorder %s95, %s96
    %p108 = scmp.eq.s32.totalorder %s23, 1
    %p109 = por %p107, %p108
    %p111 = scmp.ne.s32.totalorder %s96, %s110
    %p112 = scmp.eq.s32.totalorder %s23, 0
    %p113 = por %p111, %p112
    %s115 = sadd.s32 %s114, 1
    %p118 = scmp.eq.s32.totalorder %s17, 1
    %p119 = scmp.ne.s32.totalorder %s114, %s116
    %p120 = scmp.eq.s32.totalorder %s17, 0
    %p121 = por %p119, %p120
    %p122 = scmp.ne.s32.totalorder %s114, %s116
    %p123 = scmp.eq.s32.totalorder %s22, 1
    %p124 = por %p122, %p123
    %p125 = scmp.ne.s32.totalorder %s116, %s117
    %p126 = scmp.eq.s32.totalorder %s22, 0
    %p127 = por %p125, %p126
    %p128 = scmp.ne.s32.totalorder %s116, %s117
    %p129 = scmp.eq.s32.totalorder %s23, 1
    %p130 = por %p128, %p129
    %p132 = scmp.ne.s32.totalorder %s117, %s131
    %p133 = scmp.eq.s32.totalorder %s23, 0
    %p134 = por %p132, %p133
    %s136 = sadd.s32 %s135, 1
    %p139 = scmp.eq.s32.totalorder %s17, 1
    %p140 = scmp.ne.s32.totalorder %s135, %s137
    %p141 = scmp.eq.s32.totalorder %s17, 0
    %p142 = por %p140, %p141
    %p143 = scmp.ne.s32.totalorder %s135, %s137
    %p144 = scmp.eq.s32.totalorder %s22, 1
    %p145 = por %p143, %p144
    %p146 = scmp.ne.s32.totalorder %s137, %s138
    %p147 = scmp.eq.s32.totalorder %s22, 0
    %p148 = por %p146, %p147
    %p149 = scmp.ne.s32.totalorder %s137, %s138
    %p150 = scmp.eq.s32.totalorder %s23, 1
    %p151 = por %p149, %p150
    %p153 = scmp.ne.s32.totalorder %s138, %s152
    %p154 = scmp.eq.s32.totalorder %s23, 0
    %p155 = por %p153, %p154
    %s157 = sadd.s32 %s156, 1
    %p160 = scmp.eq.s32.totalorder %s17, 1
    %p161 = scmp.ne.s32.totalorder %s156, %s158
    %p162 = scmp.eq.s32.totalorder %s17, 0
    %p163 = por %p161, %p162
    %p164 = scmp.ne.s32.totalorder %s156, %s158
    %p165 = scmp.eq.s32.totalorder %s22, 1
    %p166 = por %p164, %p165
    %p167 = scmp.ne.s32.totalorder %s158, %s159
    %p168 = scmp.eq.s32.totalorder %s22, 0
    %p169 = por %p167, %p168
    %p170 = scmp.ne.s32.totalorder %s158, %s159
    %p171 = scmp.eq.s32.totalorder %s23, 1
    %p172 = por %p170, %p171
    %p174 = scmp.ne.s32.totalorder %s159, %s173
    %p175 = scmp.eq.s32.totalorder %s23, 0
    %p176 = por %p174, %p175
    %s178 = sadd.s32 %s177, 1
    %p181 = scmp.eq.s32.totalorder %s17, 1
    %p182 = scmp.ne.s32.totalorder %s177, %s179
    %p183 = scmp.eq.s32.totalorder %s17, 0
    %p184 = por %p182, %p183
    %p185 = scmp.ne.s32.totalorder %s177, %s179
    %p186 = scmp.eq.s32.totalorder %s22, 1
    %p187 = por %p185, %p186
    %p188 = scmp.ne.s32.totalorder %s179, %s180
    %p189 = scmp.eq.s32.totalorder %s22, 0
    %p190 = por %p188, %p189
    %p191 = scmp.ne.s32.totalorder %s179, %s180
    %p192 = scmp.eq.s32.totalorder %s23, 1
    %p193 = por %p191, %p192
    %p195 = scmp.ne.s32.totalorder %s180, %s194
    %p196 = scmp.eq.s32.totalorder %s23, 0
    %p197 = por %p195, %p196
    %s198 = ssub.s32 %s17, %s24
    %p199 = scmp.eq.s32.totalorder %s198, 0
    %s201 = sadd.s32 %s200, 1
    %s202 = scalar_select %p199, %s200, %s201
    %p205 = pneg %p199
    %p206 = scmp.eq.s32.totalorder %s17, 1
    %p207 = por %p205, %p206
    %p208 = scmp.ne.s32.totalorder %s200, %s203
    %p209 = scmp.eq.s32.totalorder %s17, 0
    %p210 = por %p208, %p209
    %p211 = scmp.ne.s32.totalorder %s200, %s203
    %p212 = scmp.eq.s32.totalorder %s22, 1
    %p213 = por %p211, %p212
    %p214 = scmp.ne.s32.totalorder %s203, %s204
    %p215 = scmp.eq.s32.totalorder %s22, 0
    %p216 = por %p214, %p215
    %p217 = scmp.ne.s32.totalorder %s203, %s204
    %p218 = scmp.eq.s32.totalorder %s23, 1
    %p219 = por %p217, %p218
    %p221 = scmp.ne.s32.totalorder %s204, %s220
    %p222 = scmp.eq.s32.totalorder %s23, 0
    %p223 = por %p221, %p222
    %s224 = ssub.s32 %s17, %s24
    %p225 = scmp.eq.s32.totalorder %s224, 0
    %s227 = sadd.s32 %s226, 1
    %s228 = scalar_select %p225, %s226, %s227
    %p231 = pneg %p225
    %p232 = scmp.eq.s32.totalorder %s17, 1
    %p233 = por %p231, %p232
    %p234 = scmp.ne.s32.totalorder %s226, %s229
    %p235 = scmp.eq.s32.totalorder %s17, 0
    %p236 = por %p234, %p235
    %p237 = scmp.ne.s32.totalorder %s226, %s229
    %p238 = scmp.eq.s32.totalorder %s22, 1
    %p239 = por %p237, %p238
    %p240 = scmp.ne.s32.totalorder %s229, %s230
    %p241 = scmp.eq.s32.totalorder %s22, 0
    %p242 = por %p240, %p241
    %p243 = scmp.ne.s32.totalorder %s229, %s230
    %p244 = scmp.eq.s32.totalorder %s23, 1
    %p245 = por %p243, %p244
    %p247 = scmp.ne.s32.totalorder %s230, %s246
    %p248 = scmp.eq.s32.totalorder %s23, 0
    %p249 = por %p247, %p248
    %s250 = ssub.s32 %s17, %s24
    %p251 = scmp.eq.s32.totalorder %s250, 0
    %s253 = sadd.s32 %s252, 1
    %s254 = scalar_select %p251, %s252, %s253
    %p257 = pneg %p251
    %p258 = scmp.eq.s32.totalorder %s17, 1
    %p259 = por %p257, %p258
    %p260 = scmp.ne.s32.totalorder %s252, %s255
    %p261 = scmp.eq.s32.totalorder %s17, 0
    %p262 = por %p260, %p261
    %p263 = scmp.ne.s32.totalorder %s252, %s255
    %p264 = scmp.eq.s32.totalorder %s22, 1
    %p265 = por %p263, %p264
    %p266 = scmp.ne.s32.totalorder %s255, %s256
    %p267 = scmp.eq.s32.totalorder %s22, 0
    %p268 = por %p266, %p267
    %p269 = scmp.ne.s32.totalorder %s255, %s256
    %p270 = scmp.eq.s32.totalorder %s23, 1
    %p271 = por %p269, %p270
    %p273 = scmp.ne.s32.totalorder %s256, %s272
    %p274 = scmp.eq.s32.totalorder %s23, 0
    %p275 = por %p273, %p274
    %p276 = scmp.le.s32.totalorder 1, %s17
    %p277 = scmp.lt.s32.totalorder %s17, 3
    %p278 = pnand %p276, %p277
    %p279 = pneg %p278
    // Predicated region
    $region9: #{_fused_forward.1} parent=5 // pred_check
      _
    $region10: #{_fused_forward.1} parent=5 // pred_check_branch
      %281 = sbr.rel (%p278) target = $region12
    $region11: #{_fused_forward.1} parent=5 // pred_region
      %s282 = ssub.s32 %s17, 1
      // Predicated region
      $region13: #{_fused_forward.1} parent=11 // pred_check
        %p283 = pneg %p64
      $region14: #{_fused_forward.1} parent=11 // pred_check_branch
        %285 = sbr.rel (%p283) target = $region16
      $region15: #{_fused_forward.1} parent=11 // pred_region
        _
      $region16: #{_fused_forward.1} parent=11 // pred_fallthru
        _
      // Predicated region
      $region17: #{_fused_forward.1} parent=11 // pred_check
        %p286 = pneg %p85
      $region18: #{_fused_forward.1} parent=11 // pred_check_branch
        %288 = sbr.rel (%p286) target = $region20
      $region19: #{_fused_forward.1} parent=11 // pred_region
        _
      $region20: #{_fused_forward.1} parent=11 // pred_fallthru
        _
      // Predicated region
      $region21: #{_fused_forward.1} parent=11 // pred_check
        %p289 = pneg %p106
      $region22: #{_fused_forward.1} parent=11 // pred_check_branch
        %291 = sbr.rel (%p289) target = $region24
      $region23: #{_fused_forward.1} parent=11 // pred_region
        _
      $region24: #{_fused_forward.1} parent=11 // pred_fallthru
        _
      // Predicated region
      $region25: #{_fused_forward.1} parent=11 // pred_check
        %p292 = pneg %p127
      $region26: #{_fused_forward.1} parent=11 // pred_check_branch
        %294 = sbr.rel (%p292) target = $region28
      $region27: #{_fused_forward.1} parent=11 // pred_region
        _
      $region28: #{_fused_forward.1} parent=11 // pred_fallthru
        _
      // Predicated region
      $region29: #{_fused_forward.1} parent=11 // pred_check
        %p295 = pneg %p148
      $region30: #{_fused_forward.1} parent=11 // pred_check_branch
        %297 = sbr.rel (%p295) target = $region32
      $region31: #{_fused_forward.1} parent=11 // pred_region
        _
      $region32: #{_fused_forward.1} parent=11 // pred_fallthru
        _
      // Predicated region
      $region33: #{_fused_forward.1} parent=11 // pred_check
        %p298 = pneg %p169
      $region34: #{_fused_forward.1} parent=11 // pred_check_branch
        %300 = sbr.rel (%p298) target = $region36
      $region35: #{_fused_forward.1} parent=11 // pred_region
        _
      $region36: #{_fused_forward.1} parent=11 // pred_fallthru
        _
      // Predicated region
      $region37: #{_fused_forward.1} parent=11 // pred_check
        %p301 = pneg %p190
      $region38: #{_fused_forward.1} parent=11 // pred_check_branch
        %303 = sbr.rel (%p301) target = $region40
      $region39: #{_fused_forward.1} parent=11 // pred_region
        _
      $region40: #{_fused_forward.1} parent=11 // pred_fallthru
        _
    $region12: #{_fused_forward.1} parent=5 // pred_fallthru
      _
    %p304 = scmp.lt.s32.totalorder %s17, 2
    // Predicated region
    $region41: #{_fused_forward.1} parent=5 // pred_check
      %p305 = pneg %p304
    $region42: #{_fused_forward.1} parent=5 // pred_check_branch
      %307 = sbr.rel (%p305) target = $region44
    $region43: #{_fused_forward.1} parent=5 // pred_region
      // Predicated region
      $region45: #{_fused_forward.1} parent=43 // pred_check
        %p308 = pneg %p37
      $region46: #{_fused_forward.1} parent=43 // pred_check_branch
        %310 = sbr.rel (%p308) target = $region48
      $region47: #{_fused_forward.1} parent=43 // pred_region
        %p311 = scmp.lt.s32.totalorder %s17, 1
        %s312 = scalar_select %p311, %s17, 1
        %s313 = smul.addr %s312, 10
        %s314 = smul.addr %s313, 8
        %s315 = scalar_lea.vmem %s0, %s314
      $region48: #{_fused_forward.1} parent=43 // pred_fallthru
        _
    $region44: #{_fused_forward.1} parent=5 // pred_fallthru
      _
    %p316 = scmp.le.s32.totalorder 1, %s17
    %p317 = scmp.lt.s32.totalorder %s17, 3
    %p318 = pnand %p316, %p317
    %p319 = pneg %p318
    // Predicated region
    $region49: #{_fused_forward.1} parent=5 // pred_check
      _
    $region50: #{_fused_forward.1} parent=5 // pred_check_branch
      %321 = sbr.rel (%p318) target = $region52
    $region51: #{_fused_forward.1} parent=5 // pred_region
      %s322 = ssub.s32 %s17, 1
      %p323 = scmp.lt.s32.totalorder %s22, 1
      %s324 = scalar_select %p323, %s22, 1
      %s325 = smul.addr %s324, 10
      %s326 = smul.addr %s325, 8
      %s327 = scalar_lea.vmem %s0, %s326
      %p328 = pneg %p43
      %p329 = pneg %p40
      %p330 = pneg %p64
      %p331 = pneg %p61
      %p332 = pneg %p85
      %p333 = pneg %p82
      %p334 = pneg %p106
      %p335 = pneg %p103
      %p336 = pneg %p127
      %p337 = pneg %p124
      %p338 = pneg %p148
      %p339 = pneg %p145
      %p340 = pneg %p169
      %p341 = pneg %p166
      %p342 = pneg %p190
      %p343 = pneg %p187
      %p344 = pneg %p216
      %p345 = pneg %p213
      %p346 = scmp.lt.s32.totalorder %s22, 1
      %s347 = scalar_select %p346, %s22, 1
      %s348 = smul.addr %s347, 2
      %s349 = smul.addr %s348, 8
      %s350 = scalar_lea.vmem %s8, %s349
      %p351 = pneg %p242
      %p352 = pneg %p239
      %p353 = scmp.lt.s32.totalorder %s22, 1
      %s354 = scalar_select %p353, %s22, 1
      %s355 = smul.addr %s354, 4
      %s356 = smul.addr %s355, 8
      %s357 = scalar_lea.vmem %s9, %s356
      %p358 = pneg %p268
      %p359 = pneg %p265
      %p360 = scmp.lt.s32.totalorder %s22, 1
      %s361 = scalar_select %p360, %s22, 1
      %s362 = smul.addr %s361, 4
      %s363 = smul.addr %s362, 8
      %s364 = scalar_lea.vmem %s10, %s363
      %p365 = scmp.lt.s32.totalorder %s22, 1
      %s366 = scalar_select %p365, %s22, 1
      %s367 = smul.addr %s366, 10
      %s368 = smul.addr %s367, 8
      %s369 = scalar_lea.vmem %s0, %s368
      %p370 = scmp.lt.s32.totalorder %s22, 1
      %s371 = scalar_select %p370, %s22, 1
      %s372 = smul.addr %s371, 2
      %s373 = smul.addr %s372, 8
      %s374 = scalar_lea.vmem %s8, %s373
      %p375 = scmp.lt.s32.totalorder %s22, 1
      %s376 = scalar_select %p375, %s22, 1
      %s377 = smul.addr %s376, 4
      %s378 = smul.addr %s377, 8
      %s379 = scalar_lea.vmem %s9, %s378
      %p380 = scmp.lt.s32.totalorder %s22, 1
      %s381 = scalar_select %p380, %s22, 1
      %s382 = smul.addr %s381, 4
      %s383 = smul.addr %s382, 8
      %s384 = scalar_lea.vmem %s10, %s383
      %v385 = vld [vmem:[%s1] sm:$0xff]
      %v386 = vld [vmem:[%s369] sm:$0xff]
      %v387 = vld [vmem:[%s369 + $0x8] sm:$0xff]
      %v388 = vld [vmem:[%s369 + $0x10] sm:$0xff]
      %v389 = vld [vmem:[%s369 + $0x18] sm:$0xff]
      %v390 = vld [vmem:[%s369 + $0x20] sm:$0xff]
      %v391 = vld [vmem:[%s369 + $0x28] sm:$0xff]
      %v392 = vld [vmem:[%s369 + $0x30] sm:$0xff]
      %v393 = vld [vmem:[%s369 + $0x38] sm:$0xff]
      %v394 = vld [vmem:[%s369 + $0x40] sm:$0xf]
      %v395 = vld [vmem:[%s369 + $0x48] sm:$0xf]
      %v396 = vld [vmem:[%s2] sm:$0xff]
      %398 = vset.pattern.permute.xlu0 0
      %399 = vperm.xlu0 %398, %v396
      %v400 = vpop.permute.xlu0 %399
      %vm402 = vcmask 293888
      %v404 = vsel %vm402, %v385, 0
      %vm406 = vcmask 1043456
      %v408 = vsel %vm406, %v394, 0
      %v411 = vsel %vm406, %v395, 0
      %413 = vmatprep.subr.mxu0 0.0
      %414 = vmatpush1.msra.mxu0 0.0
      %415 = vmatprep.subr.mxu0 0.0
      %416 = vmatpush1.msra.mxu0 0.0
      %417 = vmatprep.subr.mxu0 0.0
      %418 = vmatpush1.msra.mxu0 0.0
      %419 = vmatprep.subr.mxu0 0.0
      %420 = vmatpush1.msra.mxu0 0.0
      %421 = vmatprep.subr.mxu0 0.0
      %422 = vmatpush1.msra.mxu0 0.0
      %423 = vmatprep.subr.mxu0 0.0
      %424 = vmatpush1.msra.mxu0 0.0
      %425 = vmatprep.subr.mxu0 0.0
      %426 = vmatpush1.msra.mxu0 0.0
      %427 = vmatprep.subr.mxu0 0.0
      %428 = vmatpush1.msra.mxu0 0.0
      %429 = vmatprep.subr.mxu0 0.0
      %430 = vmatpush1.msra.mxu0 0.0
      %431 = vmatprep.subr.mxu0 0.0
      %432 = vmatpush1.msra.mxu0 0.0
      %433 = vmatprep.subr.mxu0 0.0
      %434 = vmatpush1.msra.mxu0 0.0
      %435 = vmatprep.subr.mxu0 %v411
      %436 = vmatpush1.msra.mxu0 %v408
      %437 = vmatprep.subr.mxu0 %v393
      %438 = vmatpush1.msra.mxu0 %v392
      %439 = vmatprep.subr.mxu0 %v391
      %440 = vmatpush1.msra.mxu0 %v390
      %441 = vmatprep.subr.mxu0 %v389
      %442 = vmatpush1.msra.mxu0 %v388
      %443 = vmatprep.subr.mxu0 %v387
      %444 = vmatpush1.msra.mxu0 %v386
      %445 = vmatprep.subr.mxu0 0.0
      %446 = vmatpush2.msra.mxu0 0.0
      %447 = vmatprep.subr.mxu0 0.0
      %448 = vmatpush2.msra.mxu0 0.0
      %449 = vmatprep.subr.mxu0 0.0
      %450 = vmatpush2.msra.mxu0 0.0
      %451 = vmatprep.subr.mxu0 0.0
      %452 = vmatpush2.msra.mxu0 0.0
      %453 = vmatprep.subr.mxu0 0.0
      %454 = vmatpush2.msra.mxu0 0.0
      %455 = vmatprep.subr.mxu0 0.0
      %456 = vmatpush2.msra.mxu0 0.0
      %457 = vmatprep.subr.mxu0 0.0
      %458 = vmatpush2.msra.mxu0 0.0
      %459 = vmatprep.subr.mxu0 0.0
      %460 = vmatpush2.msra.mxu0 0.0
      %461 = vmatprep.subr.mxu0 0.0
      %462 = vmatpush2.msra.mxu0 0.0
      %463 = vmatprep.subr.mxu0 0.0
      %464 = vmatpush2.msra.mxu0 0.0
      %465 = vmatprep.subr.mxu0 0.0
      %466 = vmatpush2.msra.mxu0 0.0
      %467 = vmatprep.subr.mxu0 0.0
      %468 = vmatpush2.msra.mxu0 0.0
      %469 = vmatprep.subr.mxu0 0.0
      %470 = vmatpush2.msra.mxu0 0.0
      %471 = vmatprep.subr.mxu0 0.0
      %472 = vmatpush2.msra.mxu0 0.0
      %473 = vmatprep.subr.mxu0 0.0
      %474 = vmatpush2.msra.mxu0 0.0
      %475 = vmatprep.subr.mxu0 0.0
      %476 = vmatpush2.msra.mxu0 0.0
      %477 = vmatprep.mubr.f32.mxu0 0.0
      %478 = vmatmul.mubr.f32.gmra.mxu0 %v404
      %v479 = vpop.f32.mrf.mxu0
      %v480 = vadd.f32 %v400, %v479
      %v481 = vpop.f32.mrf.mxu0
      %v482 = vadd.f32 %v400, %v481
      %483 = vdwg.mxu0
      %v484 = vmax.f32 %v480, 0.0
      %v485 = vmax.f32 %v482, 0.0
      %486 = vst [vmem:[%s374] sm:$0xff] %v484
      %487 = vst [vmem:[%s374 + $0x8] sm:$0xff] %v485
      %v488 = vld [vmem:[%s4] sm:$0xff]
      %v489 = vld [vmem:[%s4 + $0x8] sm:$0xff]
      %491 = vset.pattern.permute.xlu0 0
      %492 = vperm.xlu0 %491, %v488
      %v493 = vpop.permute.xlu0 %492
      %496 = vset.pattern.permute.xlu0 0
      %497 = vperm.xlu0 %496, %v489
      %v498 = vpop.permute.xlu0 %497
      %v500 = vadd.f32 %v493, 0.0
      %v501 = vadd.f32 %v498, 0.0
      %502 = vrot.lane.b32.xlu0 %v484, 17
      %v503 = vpop.permute.xlu0 %502
      %504 = vrot.lane.b32.xlu0 %v485, 17
      %v505 = vpop.permute.xlu0 %504
      %v506 = vlaneseq
      %v507 = vand.u32 %v506, 127
      %vm508 = vcmp.lt.s32.totalorder %v507, 17
      %v509 = vsel %vm508, %v503, %v505
      %v510 = vsel %vm508, %v505, %v503
      %v511 = vld [vmem:[%s7] sm:$0x3]
      %v513 = vlaneseq
      %v514 = vshrl.u32 %v513, 7
      %v515 = vsub.s32 0, %v514
      %v516 = vrot.slane %v511, %v515
      %v517 = vlaneseq
      %v518 = vshrl.u32 %v517, 7
      %v519 = vsub.s32 1, %v518
      %v520 = vrot.slane %v511, %v519
      %v523 = vmul.f32 %v510, %v516
      %v524 = vmul.f32 %v509, %v520
      %v525 = vld [vmem:[%s3] sm:$0xff]
      %v526 = vld [vmem:[%s3 + $0x8] sm:$0xff]
      %vm527 = vcmask 64512
      %v529 = vsel %vm527, %v525, 0
      %v532 = vsel %vm527, %v526, 0
      %534 = vmatprep.subr.mxu0 0.0
      %535 = vmatpush1.msra.mxu0 0.0
      %536 = vmatprep.subr.mxu0 0.0
      %537 = vmatpush1.msra.mxu0 0.0
      %538 = vmatprep.subr.mxu0 0.0
      %539 = vmatpush1.msra.mxu0 0.0
      %540 = vmatprep.subr.mxu0 0.0
      %541 = vmatpush1.msra.mxu0 0.0
      %542 = vmatprep.subr.mxu0 0.0
      %543 = vmatpush1.msra.mxu0 0.0
      %544 = vmatprep.subr.mxu0 0.0
      %545 = vmatpush1.msra.mxu0 0.0
      %546 = vmatprep.subr.mxu0 0.0
      %547 = vmatpush1.msra.mxu0 0.0
      %548 = vmatprep.subr.mxu0 0.0
      %549 = vmatpush1.msra.mxu0 0.0
      %550 = vmatprep.subr.mxu0 0.0
      %551 = vmatpush1.msra.mxu0 0.0
      %552 = vmatprep.subr.mxu0 0.0
      %553 = vmatpush1.msra.mxu0 0.0
      %554 = vmatprep.subr.mxu0 0.0
      %555 = vmatpush1.msra.mxu0 0.0
      %556 = vmatprep.subr.mxu0 0.0
      %557 = vmatpush1.msra.mxu0 0.0
      %558 = vmatprep.subr.mxu0 0.0
      %559 = vmatpush1.msra.mxu0 0.0
      %560 = vmatprep.subr.mxu0 0.0
      %561 = vmatpush1.msra.mxu0 0.0
      %562 = vmatprep.subr.mxu0 0.0
      %563 = vmatpush1.msra.mxu0 0.0
      %564 = vmatprep.subr.mxu0 %v524
      %565 = vmatpush1.msra.mxu0 %v523
      %566 = vmatprep.subr.mxu0 0.0
      %567 = vmatpush2.msra.mxu0 0.0
      %568 = vmatprep.subr.mxu0 0.0
      %569 = vmatpush2.msra.mxu0 0.0
      %570 = vmatprep.subr.mxu0 0.0
      %571 = vmatpush2.msra.mxu0 0.0
      %572 = vmatprep.subr.mxu0 0.0
      %573 = vmatpush2.msra.mxu0 0.0
      %574 = vmatprep.subr.mxu0 0.0
      %575 = vmatpush2.msra.mxu0 0.0
      %576 = vmatprep.subr.mxu0 0.0
      %577 = vmatpush2.msra.mxu0 0.0
      %578 = vmatprep.subr.mxu0 0.0
      %579 = vmatpush2.msra.mxu0 0.0
      %580 = vmatprep.subr.mxu0 0.0
      %581 = vmatpush2.msra.mxu0 0.0
      %582 = vmatprep.subr.mxu0 0.0
      %583 = vmatpush2.msra.mxu0 0.0
      %584 = vmatprep.subr.mxu0 0.0
      %585 = vmatpush2.msra.mxu0 0.0
      %586 = vmatprep.subr.mxu0 0.0
      %587 = vmatpush2.msra.mxu0 0.0
      %588 = vmatprep.subr.mxu0 0.0
      %589 = vmatpush2.msra.mxu0 0.0
      %590 = vmatprep.subr.mxu0 0.0
      %591 = vmatpush2.msra.mxu0 0.0
      %592 = vmatprep.subr.mxu0 0.0
      %593 = vmatpush2.msra.mxu0 0.0
      %594 = vmatprep.subr.mxu0 0.0
      %595 = vmatpush2.msra.mxu0 0.0
      %596 = vmatprep.subr.mxu0 0.0
      %597 = vmatpush2.msra.mxu0 0.0
      %598 = vmatprep.mubr.f32.mxu0 0.0
      %599 = vmatmul.mubr.f32.gmra.mxu0 %v529
      %v600 = vpop.f32.mrf.mxu0
      %v601 = vadd.f32 0.0, %v600
      %v602 = vpop.f32.mrf.mxu0
      %v603 = vadd.f32 0.0, %v602
      %604 = vmatprep.mubr.f32.mxu0 0.0
      %605 = vmatmul.mubr.f32.gmra.mxu0 %v532
      %v606 = vpop.f32.mrf.mxu0
      %v607 = vadd.f32 0.0, %v606
      %v608 = vpop.f32.mrf.mxu0
      %v609 = vadd.f32 0.0, %v608
      %610 = vdwg.mxu0
      %v611 = vadd.f32 %v500, %v601
      %v612 = vadd.f32 %v500, %v603
      %v613 = vadd.f32 %v501, %v607
      %v614 = vadd.f32 %v501, %v609
      %615 = vrot.lane.b32.xlu0 %v484, 16
      %v616 = vpop.permute.xlu0 %615
      %617 = vrot.lane.b32.xlu0 %v485, 16
      %v618 = vpop.permute.xlu0 %617
      %vm619 = vcmp.lt.s32.totalorder %v507, 16
      %v620 = vsel %vm619, %v616, %v618
      %v621 = vsel %vm619, %v618, %v616
      %s622 = scalar_lea.vmem %s7, 2
      %v623 = vld [vmem:[%s622] sm:$0x3]
      %v625 = vlaneseq
      %v626 = vshrl.u32 %v625, 7
      %v627 = vsub.s32 0, %v626
      %v628 = vrot.slane %v623, %v627
      %v629 = vlaneseq
      %v630 = vshrl.u32 %v629, 7
      %v631 = vsub.s32 1, %v630
      %v632 = vrot.slane %v623, %v631
      %v635 = vmul.f32 %v621, %v628
      %v636 = vmul.f32 %v620, %v632
      %s637 = scalar_lea.vmem %s3, 16
      %v638 = vld [vmem:[%s637] sm:$0xff]
      %v639 = vld [vmem:[%s637 + $0x8] sm:$0xff]
      %v641 = vsel %vm527, %v638, 0
      %v644 = vsel %vm527, %v639, 0
      %646 = vmatprep.subr.mxu0 0.0
      %647 = vmatpush1.msra.mxu0 0.0
      %648 = vmatprep.subr.mxu0 0.0
      %649 = vmatpush1.msra.mxu0 0.0
      %650 = vmatprep.subr.mxu0 0.0
      %651 = vmatpush1.msra.mxu0 0.0
      %652 = vmatprep.subr.mxu0 0.0
      %653 = vmatpush1.msra.mxu0 0.0
      %654 = vmatprep.subr.mxu0 0.0
      %655 = vmatpush1.msra.mxu0 0.0
      %656 = vmatprep.subr.mxu0 0.0
      %657 = vmatpush1.msra.mxu0 0.0
      %658 = vmatprep.subr.mxu0 0.0
      %659 = vmatpush1.msra.mxu0 0.0
      %660 = vmatprep.subr.mxu0 0.0
      %661 = vmatpush1.msra.mxu0 0.0
      %662 = vmatprep.subr.mxu0 0.0
      %663 = vmatpush1.msra.mxu0 0.0
      %664 = vmatprep.subr.mxu0 0.0
      %665 = vmatpush1.msra.mxu0 0.0
      %666 = vmatprep.subr.mxu0 0.0
      %667 = vmatpush1.msra.mxu0 0.0
      %668 = vmatprep.subr.mxu0 0.0
      %669 = vmatpush1.msra.mxu0 0.0
      %670 = vmatprep.subr.mxu0 0.0
      %671 = vmatpush1.msra.mxu0 0.0
      %672 = vmatprep.subr.mxu0 0.0
      %673 = vmatpush1.msra.mxu0 0.0
      %674 = vmatprep.subr.mxu0 0.0
      %675 = vmatpush1.msra.mxu0 0.0
      %676 = vmatprep.subr.mxu0 %v636
      %677 = vmatpush1.msra.mxu0 %v635
      %678 = vmatprep.subr.mxu0 0.0
      %679 = vmatpush2.msra.mxu0 0.0
      %680 = vmatprep.subr.mxu0 0.0
      %681 = vmatpush2.msra.mxu0 0.0
      %682 = vmatprep.subr.mxu0 0.0
      %683 = vmatpush2.msra.mxu0 0.0
      %684 = vmatprep.subr.mxu0 0.0
      %685 = vmatpush2.msra.mxu0 0.0
      %686 = vmatprep.subr.mxu0 0.0
      %687 = vmatpush2.msra.mxu0 0.0
      %688 = vmatprep.subr.mxu0 0.0
      %689 = vmatpush2.msra.mxu0 0.0
      %690 = vmatprep.subr.mxu0 0.0
      %691 = vmatpush2.msra.mxu0 0.0
      %692 = vmatprep.subr.mxu0 0.0
      %693 = vmatpush2.msra.mxu0 0.0
      %694 = vmatprep.subr.mxu0 0.0
      %695 = vmatpush2.msra.mxu0 0.0
      %696 = vmatprep.subr.mxu0 0.0
      %697 = vmatpush2.msra.mxu0 0.0
      %698 = vmatprep.subr.mxu0 0.0
      %699 = vmatpush2.msra.mxu0 0.0
      %700 = vmatprep.subr.mxu0 0.0
      %701 = vmatpush2.msra.mxu0 0.0
      %702 = vmatprep.subr.mxu0 0.0
      %703 = vmatpush2.msra.mxu0 0.0
      %704 = vmatprep.subr.mxu0 0.0
      %705 = vmatpush2.msra.mxu0 0.0
      %706 = vmatprep.subr.mxu0 0.0
      %707 = vmatpush2.msra.mxu0 0.0
      %708 = vmatprep.subr.mxu0 0.0
      %709 = vmatpush2.msra.mxu0 0.0
      %710 = vmatprep.mubr.f32.mxu0 0.0
      %711 = vmatmul.mubr.f32.gmra.mxu0 %v641
      %v712 = vpop.f32.mrf.mxu0
      %v713 = vadd.f32 0.0, %v712
      %v714 = vpop.f32.mrf.mxu0
      %v715 = vadd.f32 0.0, %v714
      %716 = vmatprep.mubr.f32.mxu0 0.0
      %717 = vmatmul.mubr.f32.gmra.mxu0 %v644
      %v718 = vpop.f32.mrf.mxu0
      %v719 = vadd.f32 0.0, %v718
      %v720 = vpop.f32.mrf.mxu0
      %v721 = vadd.f32 0.0, %v720
      %722 = vdwg.mxu0
      %v723 = vadd.f32 %v611, %v713
      %v724 = vadd.f32 %v612, %v715
      %v725 = vadd.f32 %v613, %v719
      %v726 = vadd.f32 %v614, %v721
      %727 = vrot.lane.b32.xlu0 %v484, 15
      %v728 = vpop.permute.xlu0 %727
      %729 = vrot.lane.b32.xlu0 %v485, 15
      %v730 = vpop.permute.xlu0 %729
      %vm731 = vcmp.lt.s32.totalorder %v507, 15
      %v732 = vsel %vm731, %v728, %v730
      %v733 = vsel %vm731, %v730, %v728
      %s734 = scalar_lea.vmem %s7, 4
      %v735 = vld [vmem:[%s734] sm:$0x3]
      %v737 = vlaneseq
      %v738 = vshrl.u32 %v737, 7
      %v739 = vsub.s32 0, %v738
      %v740 = vrot.slane %v735, %v739
      %v741 = vlaneseq
      %v742 = vshrl.u32 %v741, 7
      %v743 = vsub.s32 1, %v742
      %v744 = vrot.slane %v735, %v743
      %v747 = vmul.f32 %v733, %v740
      %v748 = vmul.f32 %v732, %v744
      %s749 = scalar_lea.vmem %s3, 32
      %v750 = vld [vmem:[%s749] sm:$0xff]
      %v751 = vld [vmem:[%s749 + $0x8] sm:$0xff]
      %v753 = vsel %vm527, %v750, 0
      %v756 = vsel %vm527, %v751, 0
      %758 = vmatprep.subr.mxu0 0.0
      %759 = vmatpush1.msra.mxu0 0.0
      %760 = vmatprep.subr.mxu0 0.0
      %761 = vmatpush1.msra.mxu0 0.0
      %762 = vmatprep.subr.mxu0 0.0
      %763 = vmatpush1.msra.mxu0 0.0
      %764 = vmatprep.subr.mxu0 0.0
      %765 = vmatpush1.msra.mxu0 0.0
      %766 = vmatprep.subr.mxu0 0.0
      %767 = vmatpush1.msra.mxu0 0.0
      %768 = vmatprep.subr.mxu0 0.0
      %769 = vmatpush1.msra.mxu0 0.0
      %770 = vmatprep.subr.mxu0 0.0
      %771 = vmatpush1.msra.mxu0 0.0
      %772 = vmatprep.subr.mxu0 0.0
      %773 = vmatpush1.msra.mxu0 0.0
      %774 = vmatprep.subr.mxu0 0.0
      %775 = vmatpush1.msra.mxu0 0.0
      %776 = vmatprep.subr.mxu0 0.0
      %777 = vmatpush1.msra.mxu0 0.0
      %778 = vmatprep.subr.mxu0 0.0
      %779 = vmatpush1.msra.mxu0 0.0
      %780 = vmatprep.subr.mxu0 0.0
      %781 = vmatpush1.msra.mxu0 0.0
      %782 = vmatprep.subr.mxu0 0.0
      %783 = vmatpush1.msra.mxu0 0.0
      %784 = vmatprep.subr.mxu0 0.0
      %785 = vmatpush1.msra.mxu0 0.0
      %786 = vmatprep.subr.mxu0 0.0
      %787 = vmatpush1.msra.mxu0 0.0
      %788 = vmatprep.subr.mxu0 %v748
      %789 = vmatpush1.msra.mxu0 %v747
      %790 = vmatprep.subr.mxu0 0.0
      %791 = vmatpush2.msra.mxu0 0.0
      %792 = vmatprep.subr.mxu0 0.0
      %793 = vmatpush2.msra.mxu0 0.0
      %794 = vmatprep.subr.mxu0 0.0
      %795 = vmatpush2.msra.mxu0 0.0
      %796 = vmatprep.subr.mxu0 0.0
      %797 = vmatpush2.msra.mxu0 0.0
      %798 = vmatprep.subr.mxu0 0.0
      %799 = vmatpush2.msra.mxu0 0.0
      %800 = vmatprep.subr.mxu0 0.0
      %801 = vmatpush2.msra.mxu0 0.0
      %802 = vmatprep.subr.mxu0 0.0
      %803 = vmatpush2.msra.mxu0 0.0
      %804 = vmatprep.subr.mxu0 0.0
      %805 = vmatpush2.msra.mxu0 0.0
      %806 = vmatprep.subr.mxu0 0.0
      %807 = vmatpush2.msra.mxu0 0.0
      %808 = vmatprep.subr.mxu0 0.0
      %809 = vmatpush2.msra.mxu0 0.0
      %810 = vmatprep.subr.mxu0 0.0
      %811 = vmatpush2.msra.mxu0 0.0
      %812 = vmatprep.subr.mxu0 0.0
      %813 = vmatpush2.msra.mxu0 0.0
      %814 = vmatprep.subr.mxu0 0.0
      %815 = vmatpush2.msra.mxu0 0.0
      %816 = vmatprep.subr.mxu0 0.0
      %817 = vmatpush2.msra.mxu0 0.0
      %818 = vmatprep.subr.mxu0 0.0
      %819 = vmatpush2.msra.mxu0 0.0
      %820 = vmatprep.subr.mxu0 0.0
      %821 = vmatpush2.msra.mxu0 0.0
      %822 = vmatprep.mubr.f32.mxu0 0.0
      %823 = vmatmul.mubr.f32.gmra.mxu0 %v753
      %v824 = vpop.f32.mrf.mxu0
      %v825 = vadd.f32 0.0, %v824
      %v826 = vpop.f32.mrf.mxu0
      %v827 = vadd.f32 0.0, %v826
      %828 = vmatprep.mubr.f32.mxu0 0.0
      %829 = vmatmul.mubr.f32.gmra.mxu0 %v756
      %v830 = vpop.f32.mrf.mxu0
      %v831 = vadd.f32 0.0, %v830
      %v832 = vpop.f32.mrf.mxu0
      %v833 = vadd.f32 0.0, %v832
      %834 = vdwg.mxu0
      %v835 = vadd.f32 %v723, %v825
      %v836 = vadd.f32 %v724, %v827
      %v837 = vadd.f32 %v725, %v831
      %v838 = vadd.f32 %v726, %v833
      %839 = vrot.lane.b32.xlu0 %v484, 1
      %v840 = vpop.permute.xlu0 %839
      %841 = vrot.lane.b32.xlu0 %v485, 1
      %v842 = vpop.permute.xlu0 %841
      %vm843 = vcmp.lt.s32.totalorder %v507, 1
      %v844 = vsel %vm843, %v840, %v842
      %v845 = vsel %vm843, %v842, %v840
      %s846 = scalar_lea.vmem %s7, 6
      %v847 = vld [vmem:[%s846] sm:$0x3]
      %v849 = vlaneseq
      %v850 = vshrl.u32 %v849, 7
      %v851 = vsub.s32 0, %v850
      %v852 = vrot.slane %v847, %v851
      %v853 = vlaneseq
      %v854 = vshrl.u32 %v853, 7
      %v855 = vsub.s32 1, %v854
      %v856 = vrot.slane %v847, %v855
      %v859 = vmul.f32 %v845, %v852
      %v860 = vmul.f32 %v844, %v856
      %s861 = scalar_lea.vmem %s3, 48
      %v862 = vld [vmem:[%s861] sm:$0xff]
      %v863 = vld [vmem:[%s861 + $0x8] sm:$0xff]
      %v865 = vsel %vm527, %v862, 0
      %v868 = vsel %vm527, %v863, 0
      %870 = vmatprep.subr.mxu0 0.0
      %871 = vmatpush1.msra.mxu0 0.0
      %872 = vmatprep.subr.mxu0 0.0
      %873 = vmatpush1.msra.mxu0 0.0
      %874 = vmatprep.subr.mxu0 0.0
      %875 = vmatpush1.msra.mxu0 0.0
      %876 = vmatprep.subr.mxu0 0.0
      %877 = vmatpush1.msra.mxu0 0.0
      %878 = vmatprep.subr.mxu0 0.0
      %879 = vmatpush1.msra.mxu0 0.0
      %880 = vmatprep.subr.mxu0 0.0
      %881 = vmatpush1.msra.mxu0 0.0
      %882 = vmatprep.subr.mxu0 0.0
      %883 = vmatpush1.msra.mxu0 0.0
      %884 = vmatprep.subr.mxu0 0.0
      %885 = vmatpush1.msra.mxu0 0.0
      %886 = vmatprep.subr.mxu0 0.0
      %887 = vmatpush1.msra.mxu0 0.0
      %888 = vmatprep.subr.mxu0 0.0
      %889 = vmatpush1.msra.mxu0 0.0
      %890 = vmatprep.subr.mxu0 0.0
      %891 = vmatpush1.msra.mxu0 0.0
      %892 = vmatprep.subr.mxu0 0.0
      %893 = vmatpush1.msra.mxu0 0.0
      %894 = vmatprep.subr.mxu0 0.0
      %895 = vmatpush1.msra.mxu0 0.0
      %896 = vmatprep.subr.mxu0 0.0
      %897 = vmatpush1.msra.mxu0 0.0
      %898 = vmatprep.subr.mxu0 0.0
      %899 = vmatpush1.msra.mxu0 0.0
      %900 = vmatprep.subr.mxu0 %v860
      %901 = vmatpush1.msra.mxu0 %v859
      %902 = vmatprep.subr.mxu0 0.0
      %903 = vmatpush2.msra.mxu0 0.0
      %904 = vmatprep.subr.mxu0 0.0
      %905 = vmatpush2.msra.mxu0 0.0
      %906 = vmatprep.subr.mxu0 0.0
      %907 = vmatpush2.msra.mxu0 0.0
      %908 = vmatprep.subr.mxu0 0.0
      %909 = vmatpush2.msra.mxu0 0.0
      %910 = vmatprep.subr.mxu0 0.0
      %911 = vmatpush2.msra.mxu0 0.0
      %912 = vmatprep.subr.mxu0 0.0
      %913 = vmatpush2.msra.mxu0 0.0
      %914 = vmatprep.subr.mxu0 0.0
      %915 = vmatpush2.msra.mxu0 0.0
      %916 = vmatprep.subr.mxu0 0.0
      %917 = vmatpush2.msra.mxu0 0.0
      %918 = vmatprep.subr.mxu0 0.0
      %919 = vmatpush2.msra.mxu0 0.0
      %920 = vmatprep.subr.mxu0 0.0
      %921 = vmatpush2.msra.mxu0 0.0
      %922 = vmatprep.subr.mxu0 0.0
      %923 = vmatpush2.msra.mxu0 0.0
      %924 = vmatprep.subr.mxu0 0.0
      %925 = vmatpush2.msra.mxu0 0.0
      %926 = vmatprep.subr.mxu0 0.0
      %927 = vmatpush2.msra.mxu0 0.0
      %928 = vmatprep.subr.mxu0 0.0
      %929 = vmatpush2.msra.mxu0 0.0
      %930 = vmatprep.subr.mxu0 0.0
      %931 = vmatpush2.msra.mxu0 0.0
      %932 = vmatprep.subr.mxu0 0.0
      %933 = vmatpush2.msra.mxu0 0.0
      %934 = vmatprep.mubr.f32.mxu0 0.0
      %935 = vmatmul.mubr.f32.gmra.mxu0 %v865
      %v936 = vpop.f32.mrf.mxu0
      %v937 = vadd.f32 0.0, %v936
      %v938 = vpop.f32.mrf.mxu0
      %v939 = vadd.f32 0.0, %v938
      %940 = vmatprep.mubr.f32.mxu0 0.0
      %941 = vmatmul.mubr.f32.gmra.mxu0 %v868
      %v942 = vpop.f32.mrf.mxu0
      %v943 = vadd.f32 0.0, %v942
      %v944 = vpop.f32.mrf.mxu0
      %v945 = vadd.f32 0.0, %v944
      %946 = vdwg.mxu0
      %v947 = vadd.f32 %v835, %v937
      %v948 = vadd.f32 %v836, %v939
      %v949 = vadd.f32 %v837, %v943
      %v950 = vadd.f32 %v838, %v945
      %s951 = scalar_lea.vmem %s3, 64
      %v952 = vld [vmem:[%s951] sm:$0xff]
      %v953 = vld [vmem:[%s951 + $0x8] sm:$0xff]
      %v955 = vsel %vm527, %v952, 0
      %v958 = vsel %vm527, %v953, 0
      %960 = vmatprep.subr.mxu0 0.0
      %961 = vmatpush1.msra.mxu0 0.0
      %962 = vmatprep.subr.mxu0 0.0
      %963 = vmatpush1.msra.mxu0 0.0
      %964 = vmatprep.subr.mxu0 0.0
      %965 = vmatpush1.msra.mxu0 0.0
      %966 = vmatprep.subr.mxu0 0.0
      %967 = vmatpush1.msra.mxu0 0.0
      %968 = vmatprep.subr.mxu0 0.0
      %969 = vmatpush1.msra.mxu0 0.0
      %970 = vmatprep.subr.mxu0 0.0
      %971 = vmatpush1.msra.mxu0 0.0
      %972 = vmatprep.subr.mxu0 0.0
      %973 = vmatpush1.msra.mxu0 0.0
      %974 = vmatprep.subr.mxu0 0.0
      %975 = vmatpush1.msra.mxu0 0.0
      %976 = vmatprep.subr.mxu0 0.0
      %977 = vmatpush1.msra.mxu0 0.0
      %978 = vmatprep.subr.mxu0 0.0
      %979 = vmatpush1.msra.mxu0 0.0
      %980 = vmatprep.subr.mxu0 0.0
      %981 = vmatpush1.msra.mxu0 0.0
      %982 = vmatprep.subr.mxu0 0.0
      %983 = vmatpush1.msra.mxu0 0.0
      %984 = vmatprep.subr.mxu0 0.0
      %985 = vmatpush1.msra.mxu0 0.0
      %986 = vmatprep.subr.mxu0 0.0
      %987 = vmatpush1.msra.mxu0 0.0
      %988 = vmatprep.subr.mxu0 0.0
      %989 = vmatpush1.msra.mxu0 0.0
      %990 = vmatprep.subr.mxu0 %v485
      %991 = vmatpush1.msra.mxu0 %v484
      %992 = vmatprep.subr.mxu0 0.0
      %993 = vmatpush2.msra.mxu0 0.0
      %994 = vmatprep.subr.mxu0 0.0
      %995 = vmatpush2.msra.mxu0 0.0
      %996 = vmatprep.subr.mxu0 0.0
      %997 = vmatpush2.msra.mxu0 0.0
      %998 = vmatprep.subr.mxu0 0.0
      %999 = vmatpush2.msra.mxu0 0.0
      %1000 = vmatprep.subr.mxu0 0.0
      %1001 = vmatpush2.msra.mxu0 0.0
      %1002 = vmatprep.subr.mxu0 0.0
      %1003 = vmatpush2.msra.mxu0 0.0
      %1004 = vmatprep.subr.mxu0 0.0
      %1005 = vmatpush2.msra.mxu0 0.0
      %1006 = vmatprep.subr.mxu0 0.0
      %1007 = vmatpush2.msra.mxu0 0.0
      %1008 = vmatprep.subr.mxu0 0.0
      %1009 = vmatpush2.msra.mxu0 0.0
      %1010 = vmatprep.subr.mxu0 0.0
      %1011 = vmatpush2.msra.mxu0 0.0
      %1012 = vmatprep.subr.mxu0 0.0
      %1013 = vmatpush2.msra.mxu0 0.0
      %1014 = vmatprep.subr.mxu0 0.0
      %1015 = vmatpush2.msra.mxu0 0.0
      %1016 = vmatprep.subr.mxu0 0.0
      %1017 = vmatpush2.msra.mxu0 0.0
      %1018 = vmatprep.subr.mxu0 0.0
      %1019 = vmatpush2.msra.mxu0 0.0
      %1020 = vmatprep.subr.mxu0 0.0
      %1021 = vmatpush2.msra.mxu0 0.0
      %1022 = vmatprep.subr.mxu0 0.0
      %1023 = vmatpush2.msra.mxu0 0.0
      %1024 = vmatprep.mubr.f32.mxu0 0.0
      %1025 = vmatmul.mubr.f32.gmra.mxu0 %v955
      %v1026 = vpop.f32.mrf.mxu0
      %v1027 = vadd.f32 0.0, %v1026
      %v1028 = vpop.f32.mrf.mxu0
      %v1029 = vadd.f32 0.0, %v1028
      %1030 = vmatprep.mubr.f32.mxu0 0.0
      %1031 = vmatmul.mubr.f32.gmra.mxu0 %v958
      %v1032 = vpop.f32.mrf.mxu0
      %v1033 = vadd.f32 0.0, %v1032
      %v1034 = vpop.f32.mrf.mxu0
      %v1035 = vadd.f32 0.0, %v1034
      %1036 = vdwg.mxu0
      %v1037 = vadd.f32 %v947, %v1027
      %v1038 = vadd.f32 %v948, %v1029
      %v1039 = vadd.f32 %v949, %v1033
      %v1040 = vadd.f32 %v950, %v1035
      %1041 = vrot.lane.b32.xlu0 %v484, 127
      %v1042 = vpop.permute.xlu0 %1041
      %1043 = vrot.lane.b32.xlu0 %v485, 127
      %v1044 = vpop.permute.xlu0 %1043
      %vm1045 = vcmp.lt.s32.totalorder %v507, 127
      %v1046 = vsel %vm1045, %v1042, %v1044
      %v1047 = vsel %vm1045, %v1044, %v1042
      %s1048 = scalar_lea.vmem %s7, 10
      %v1049 = vld [vmem:[%s1048] sm:$0x3]
      %v1051 = vlaneseq
      %v1052 = vshrl.u32 %v1051, 7
      %v1053 = vsub.s32 0, %v1052
      %v1054 = vrot.slane %v1049, %v1053
      %v1055 = vlaneseq
      %v1056 = vshrl.u32 %v1055, 7
      %v1057 = vsub.s32 1, %v1056
      %v1058 = vrot.slane %v1049, %v1057
      %v1061 = vmul.f32 %v1046, %v1054
      %v1062 = vmul.f32 %v1047, %v1058
      %s1063 = scalar_lea.vmem %s3, 80
      %v1064 = vld [vmem:[%s1063] sm:$0xff]
      %v1065 = vld [vmem:[%s1063 + $0x8] sm:$0xff]
      %v1067 = vsel %vm527, %v1064, 0
      %v1070 = vsel %vm527, %v1065, 0
      %1072 = vmatprep.subr.mxu0 0.0
      %1073 = vmatpush1.msra.mxu0 0.0
      %1074 = vmatprep.subr.mxu0 0.0
      %1075 = vmatpush1.msra.mxu0 0.0
      %1076 = vmatprep.subr.mxu0 0.0
      %1077 = vmatpush1.msra.mxu0 0.0
      %1078 = vmatprep.subr.mxu0 0.0
      %1079 = vmatpush1.msra.mxu0 0.0
      %1080 = vmatprep.subr.mxu0 0.0
      %1081 = vmatpush1.msra.mxu0 0.0
      %1082 = vmatprep.subr.mxu0 0.0
      %1083 = vmatpush1.msra.mxu0 0.0
      %1084 = vmatprep.subr.mxu0 0.0
      %1085 = vmatpush1.msra.mxu0 0.0
      %1086 = vmatprep.subr.mxu0 0.0
      %1087 = vmatpush1.msra.mxu0 0.0
      %1088 = vmatprep.subr.mxu0 0.0
      %1089 = vmatpush1.msra.mxu0 0.0
      %1090 = vmatprep.subr.mxu0 0.0
      %1091 = vmatpush1.msra.mxu0 0.0
      %1092 = vmatprep.subr.mxu0 0.0
      %1093 = vmatpush1.msra.mxu0 0.0
      %1094 = vmatprep.subr.mxu0 0.0
      %1095 = vmatpush1.msra.mxu0 0.0
      %1096 = vmatprep.subr.mxu0 0.0
      %1097 = vmatpush1.msra.mxu0 0.0
      %1098 = vmatprep.subr.mxu0 0.0
      %1099 = vmatpush1.msra.mxu0 0.0
      %1100 = vmatprep.subr.mxu0 0.0
      %1101 = vmatpush1.msra.mxu0 0.0
      %1102 = vmatprep.subr.mxu0 %v1062
      %1103 = vmatpush1.msra.mxu0 %v1061
      %1104 = vmatprep.subr.mxu0 0.0
      %1105 = vmatpush2.msra.mxu0 0.0
      %1106 = vmatprep.subr.mxu0 0.0
      %1107 = vmatpush2.msra.mxu0 0.0
      %1108 = vmatprep.subr.mxu0 0.0
      %1109 = vmatpush2.msra.mxu0 0.0
      %1110 = vmatprep.subr.mxu0 0.0
      %1111 = vmatpush2.msra.mxu0 0.0
      %1112 = vmatprep.subr.mxu0 0.0
      %1113 = vmatpush2.msra.mxu0 0.0
      %1114 = vmatprep.subr.mxu0 0.0
      %1115 = vmatpush2.msra.mxu0 0.0
      %1116 = vmatprep.subr.mxu0 0.0
      %1117 = vmatpush2.msra.mxu0 0.0
      %1118 = vmatprep.subr.mxu0 0.0
      %1119 = vmatpush2.msra.mxu0 0.0
      %1120 = vmatprep.subr.mxu0 0.0
      %1121 = vmatpush2.msra.mxu0 0.0
      %1122 = vmatprep.subr.mxu0 0.0
      %1123 = vmatpush2.msra.mxu0 0.0
      %1124 = vmatprep.subr.mxu0 0.0
      %1125 = vmatpush2.msra.mxu0 0.0
      %1126 = vmatprep.subr.mxu0 0.0
      %1127 = vmatpush2.msra.mxu0 0.0
      %1128 = vmatprep.subr.mxu0 0.0
      %1129 = vmatpush2.msra.mxu0 0.0
      %1130 = vmatprep.subr.mxu0 0.0
      %1131 = vmatpush2.msra.mxu0 0.0
      %1132 = vmatprep.subr.mxu0 0.0
      %1133 = vmatpush2.msra.mxu0 0.0
      %1134 = vmatprep.subr.mxu0 0.0
      %1135 = vmatpush2.msra.mxu0 0.0
      %1136 = vmatprep.mubr.f32.mxu0 0.0
      %1137 = vmatmul.mubr.f32.gmra.mxu0 %v1067
      %v1138 = vpop.f32.mrf.mxu0
      %v1139 = vadd.f32 0.0, %v1138
      %v1140 = vpop.f32.mrf.mxu0
      %v1141 = vadd.f32 0.0, %v1140
      %1142 = vmatprep.mubr.f32.mxu0 0.0
      %1143 = vmatmul.mubr.f32.gmra.mxu0 %v1070
      %v1144 = vpop.f32.mrf.mxu0
      %v1145 = vadd.f32 0.0, %v1144
      %v1146 = vpop.f32.mrf.mxu0
      %v1147 = vadd.f32 0.0, %v1146
      %1148 = vdwg.mxu0
      %v1149 = vadd.f32 %v1037, %v1139
      %v1150 = vadd.f32 %v1038, %v1141
      %v1151 = vadd.f32 %v1039, %v1145
      %v1152 = vadd.f32 %v1040, %v1147
      %1153 = vrot.lane.b32.xlu0 %v484, 113
      %v1154 = vpop.permute.xlu0 %1153
      %1155 = vrot.lane.b32.xlu0 %v485, 113
      %v1156 = vpop.permute.xlu0 %1155
      %vm1157 = vcmp.lt.s32.totalorder %v507, 113
      %v1158 = vsel %vm1157, %v1154, %v1156
      %v1159 = vsel %vm1157, %v1156, %v1154
      %s1160 = scalar_lea.vmem %s7, 12
      %v1161 = vld [vmem:[%s1160] sm:$0x3]
      %v1163 = vlaneseq
      %v1164 = vshrl.u32 %v1163, 7
      %v1165 = vsub.s32 0, %v1164
      %v1166 = vrot.slane %v1161, %v1165
      %v1167 = vlaneseq
      %v1168 = vshrl.u32 %v1167, 7
      %v1169 = vsub.s32 1, %v1168
      %v1170 = vrot.slane %v1161, %v1169
      %v1173 = vmul.f32 %v1158, %v1166
      %v1174 = vmul.f32 %v1159, %v1170
      %s1175 = scalar_lea.vmem %s3, 96
      %v1176 = vld [vmem:[%s1175] sm:$0xff]
      %v1177 = vld [vmem:[%s1175 + $0x8] sm:$0xff]
      %v1179 = vsel %vm527, %v1176, 0
      %v1182 = vsel %vm527, %v1177, 0
      %1184 = vmatprep.subr.mxu0 0.0
      %1185 = vmatpush1.msra.mxu0 0.0
      %1186 = vmatprep.subr.mxu0 0.0
      %1187 = vmatpush1.msra.mxu0 0.0
      %1188 = vmatprep.subr.mxu0 0.0
      %1189 = vmatpush1.msra.mxu0 0.0
      %1190 = vmatprep.subr.mxu0 0.0
      %1191 = vmatpush1.msra.mxu0 0.0
      %1192 = vmatprep.subr.mxu0 0.0
      %1193 = vmatpush1.msra.mxu0 0.0
      %1194 = vmatprep.subr.mxu0 0.0
      %1195 = vmatpush1.msra.mxu0 0.0
      %1196 = vmatprep.subr.mxu0 0.0
      %1197 = vmatpush1.msra.mxu0 0.0
      %1198 = vmatprep.subr.mxu0 0.0
      %1199 = vmatpush1.msra.mxu0 0.0
      %1200 = vmatprep.subr.mxu0 0.0
      %1201 = vmatpush1.msra.mxu0 0.0
      %1202 = vmatprep.subr.mxu0 0.0
      %1203 = vmatpush1.msra.mxu0 0.0
      %1204 = vmatprep.subr.mxu0 0.0
      %1205 = vmatpush1.msra.mxu0 0.0
      %1206 = vmatprep.subr.mxu0 0.0
      %1207 = vmatpush1.msra.mxu0 0.0
      %1208 = vmatprep.subr.mxu0 0.0
      %1209 = vmatpush1.msra.mxu0 0.0
      %1210 = vmatprep.subr.mxu0 0.0
      %1211 = vmatpush1.msra.mxu0 0.0
      %1212 = vmatprep.subr.mxu0 0.0
      %1213 = vmatpush1.msra.mxu0 0.0
      %1214 = vmatprep.subr.mxu0 %v1174
      %1215 = vmatpush1.msra.mxu0 %v1173
      %1216 = vmatprep.subr.mxu0 0.0
      %1217 = vmatpush2.msra.mxu0 0.0
      %1218 = vmatprep.subr.mxu0 0.0
      %1219 = vmatpush2.msra.mxu0 0.0
      %1220 = vmatprep.subr.mxu0 0.0
      %1221 = vmatpush2.msra.mxu0 0.0
      %1222 = vmatprep.subr.mxu0 0.0
      %1223 = vmatpush2.msra.mxu0 0.0
      %1224 = vmatprep.subr.mxu0 0.0
      %1225 = vmatpush2.msra.mxu0 0.0
      %1226 = vmatprep.subr.mxu0 0.0
      %1227 = vmatpush2.msra.mxu0 0.0
      %1228 = vmatprep.subr.mxu0 0.0
      %1229 = vmatpush2.msra.mxu0 0.0
      %1230 = vmatprep.subr.mxu0 0.0
      %1231 = vmatpush2.msra.mxu0 0.0
      %1232 = vmatprep.subr.mxu0 0.0
      %1233 = vmatpush2.msra.mxu0 0.0
      %1234 = vmatprep.subr.mxu0 0.0
      %1235 = vmatpush2.msra.mxu0 0.0
      %1236 = vmatprep.subr.mxu0 0.0
      %1237 = vmatpush2.msra.mxu0 0.0
      %1238 = vmatprep.subr.mxu0 0.0
      %1239 = vmatpush2.msra.mxu0 0.0
      %1240 = vmatprep.subr.mxu0 0.0
      %1241 = vmatpush2.msra.mxu0 0.0
      %1242 = vmatprep.subr.mxu0 0.0
      %1243 = vmatpush2.msra.mxu0 0.0
      %1244 = vmatprep.subr.mxu0 0.0
      %1245 = vmatpush2.msra.mxu0 0.0
      %1246 = vmatprep.subr.mxu0 0.0
      %1247 = vmatpush2.msra.mxu0 0.0
      %1248 = vmatprep.mubr.f32.mxu0 0.0
      %1249 = vmatmul.mubr.f32.gmra.mxu0 %v1179
      %v1250 = vpop.f32.mrf.mxu0
      %v1251 = vadd.f32 0.0, %v1250
      %v1252 = vpop.f32.mrf.mxu0
      %v1253 = vadd.f32 0.0, %v1252
      %1254 = vmatprep.mubr.f32.mxu0 0.0
      %1255 = vmatmul.mubr.f32.gmra.mxu0 %v1182
      %v1256 = vpop.f32.mrf.mxu0
      %v1257 = vadd.f32 0.0, %v1256
      %v1258 = vpop.f32.mrf.mxu0
      %v1259 = vadd.f32 0.0, %v1258
      %1260 = vdwg.mxu0
      %v1261 = vadd.f32 %v1149, %v1251
      %v1262 = vadd.f32 %v1150, %v1253
      %v1263 = vadd.f32 %v1151, %v1257
      %v1264 = vadd.f32 %v1152, %v1259
      %1265 = vrot.lane.b32.xlu0 %v484, 112
      %v1266 = vpop.permute.xlu0 %1265
      %1267 = vrot.lane.b32.xlu0 %v485, 112
      %v1268 = vpop.permute.xlu0 %1267
      %vm1269 = vcmp.lt.s32.totalorder %v507, 112
      %v1270 = vsel %vm1269, %v1266, %v1268
      %v1271 = vsel %vm1269, %v1268, %v1266
      %s1272 = scalar_lea.vmem %s7, 14
      %v1273 = vld [vmem:[%s1272] sm:$0x3]
      %v1275 = vlaneseq
      %v1276 = vshrl.u32 %v1275, 7
      %v1277 = vsub.s32 0, %v1276
      %v1278 = vrot.slane %v1273, %v1277
      %v1279 = vlaneseq
      %v1280 = vshrl.u32 %v1279, 7
      %v1281 = vsub.s32 1, %v1280
      %v1282 = vrot.slane %v1273, %v1281
      %v1285 = vmul.f32 %v1270, %v1278
      %v1286 = vmul.f32 %v1271, %v1282
      %s1287 = scalar_lea.vmem %s3, 112
      %v1288 = vld [vmem:[%s1287] sm:$0xff]
      %v1289 = vld [vmem:[%s1287 + $0x8] sm:$0xff]
      %v1291 = vsel %vm527, %v1288, 0
      %v1294 = vsel %vm527, %v1289, 0
      %1296 = vmatprep.subr.mxu0 0.0
      %1297 = vmatpush1.msra.mxu0 0.0
      %1298 = vmatprep.subr.mxu0 0.0
      %1299 = vmatpush1.msra.mxu0 0.0
      %1300 = vmatprep.subr.mxu0 0.0
      %1301 = vmatpush1.msra.mxu0 0.0
      %1302 = vmatprep.subr.mxu0 0.0
      %1303 = vmatpush1.msra.mxu0 0.0
      %1304 = vmatprep.subr.mxu0 0.0
      %1305 = vmatpush1.msra.mxu0 0.0
      %1306 = vmatprep.subr.mxu0 0.0
      %1307 = vmatpush1.msra.mxu0 0.0
      %1308 = vmatprep.subr.mxu0 0.0
      %1309 = vmatpush1.msra.mxu0 0.0
      %1310 = vmatprep.subr.mxu0 0.0
      %1311 = vmatpush1.msra.mxu0 0.0
      %1312 = vmatprep.subr.mxu0 0.0
      %1313 = vmatpush1.msra.mxu0 0.0
      %1314 = vmatprep.subr.mxu0 0.0
      %1315 = vmatpush1.msra.mxu0 0.0
      %1316 = vmatprep.subr.mxu0 0.0
      %1317 = vmatpush1.msra.mxu0 0.0
      %1318 = vmatprep.subr.mxu0 0.0
      %1319 = vmatpush1.msra.mxu0 0.0
      %1320 = vmatprep.subr.mxu0 0.0
      %1321 = vmatpush1.msra.mxu0 0.0
      %1322 = vmatprep.subr.mxu0 0.0
      %1323 = vmatpush1.msra.mxu0 0.0
      %1324 = vmatprep.subr.mxu0 0.0
      %1325 = vmatpush1.msra.mxu0 0.0
      %1326 = vmatprep.subr.mxu0 %v1286
      %1327 = vmatpush1.msra.mxu0 %v1285
      %1328 = vmatprep.subr.mxu0 0.0
      %1329 = vmatpush2.msra.mxu0 0.0
      %1330 = vmatprep.subr.mxu0 0.0
      %1331 = vmatpush2.msra.mxu0 0.0
      %1332 = vmatprep.subr.mxu0 0.0
      %1333 = vmatpush2.msra.mxu0 0.0
      %1334 = vmatprep.subr.mxu0 0.0
      %1335 = vmatpush2.msra.mxu0 0.0
      %1336 = vmatprep.subr.mxu0 0.0
      %1337 = vmatpush2.msra.mxu0 0.0
      %1338 = vmatprep.subr.mxu0 0.0
      %1339 = vmatpush2.msra.mxu0 0.0
      %1340 = vmatprep.subr.mxu0 0.0
      %1341 = vmatpush2.msra.mxu0 0.0
      %1342 = vmatprep.subr.mxu0 0.0
      %1343 = vmatpush2.msra.mxu0 0.0
      %1344 = vmatprep.subr.mxu0 0.0
      %1345 = vmatpush2.msra.mxu0 0.0
      %1346 = vmatprep.subr.mxu0 0.0
      %1347 = vmatpush2.msra.mxu0 0.0
      %1348 = vmatprep.subr.mxu0 0.0
      %1349 = vmatpush2.msra.mxu0 0.0
      %1350 = vmatprep.subr.mxu0 0.0
      %1351 = vmatpush2.msra.mxu0 0.0
      %1352 = vmatprep.subr.mxu0 0.0
      %1353 = vmatpush2.msra.mxu0 0.0
      %1354 = vmatprep.subr.mxu0 0.0
      %1355 = vmatpush2.msra.mxu0 0.0
      %1356 = vmatprep.subr.mxu0 0.0
      %1357 = vmatpush2.msra.mxu0 0.0
      %1358 = vmatprep.subr.mxu0 0.0
      %1359 = vmatpush2.msra.mxu0 0.0
      %1360 = vmatprep.mubr.f32.mxu0 0.0
      %1361 = vmatmul.mubr.f32.gmra.mxu0 %v1291
      %v1362 = vpop.f32.mrf.mxu0
      %v1363 = vadd.f32 0.0, %v1362
      %v1364 = vpop.f32.mrf.mxu0
      %v1365 = vadd.f32 0.0, %v1364
      %1366 = vmatprep.mubr.f32.mxu0 0.0
      %1367 = vmatmul.mubr.f32.gmra.mxu0 %v1294
      %v1368 = vpop.f32.mrf.mxu0
      %v1369 = vadd.f32 0.0, %v1368
      %v1370 = vpop.f32.mrf.mxu0
      %v1371 = vadd.f32 0.0, %v1370
      %1372 = vdwg.mxu0
      %v1373 = vadd.f32 %v1261, %v1363
      %v1374 = vadd.f32 %v1262, %v1365
      %v1375 = vadd.f32 %v1263, %v1369
      %v1376 = vadd.f32 %v1264, %v1371
      %1377 = vrot.lane.b32.xlu0 %v484, 111
      %v1378 = vpop.permute.xlu0 %1377
      %1379 = vrot.lane.b32.xlu0 %v485, 111
      %v1380 = vpop.permute.xlu0 %1379
      %vm1381 = vcmp.lt.s32.totalorder %v507, 111
      %v1382 = vsel %vm1381, %v1378, %v1380
      %v1383 = vsel %vm1381, %v1380, %v1378
      %s1384 = scalar_lea.vmem %s7, 16
      %v1385 = vld [vmem:[%s1384] sm:$0x3]
      %v1387 = vlaneseq
      %v1388 = vshrl.u32 %v1387, 7
      %v1389 = vsub.s32 0, %v1388
      %v1390 = vrot.slane %v1385, %v1389
      %v1391 = vlaneseq
      %v1392 = vshrl.u32 %v1391, 7
      %v1393 = vsub.s32 1, %v1392
      %v1394 = vrot.slane %v1385, %v1393
      %v1397 = vmul.f32 %v1382, %v1390
      %v1398 = vmul.f32 %v1383, %v1394
      %s1399 = scalar_lea.vmem %s3, 128
      %v1400 = vld [vmem:[%s1399] sm:$0xff]
      %v1401 = vld [vmem:[%s1399 + $0x8] sm:$0xff]
      %v1403 = vsel %vm527, %v1400, 0
      %v1406 = vsel %vm527, %v1401, 0
      %1408 = vmatprep.subr.mxu0 0.0
      %1409 = vmatpush1.msra.mxu0 0.0
      %1410 = vmatprep.subr.mxu0 0.0
      %1411 = vmatpush1.msra.mxu0 0.0
      %1412 = vmatprep.subr.mxu0 0.0
      %1413 = vmatpush1.msra.mxu0 0.0
      %1414 = vmatprep.subr.mxu0 0.0
      %1415 = vmatpush1.msra.mxu0 0.0
      %1416 = vmatprep.subr.mxu0 0.0
      %1417 = vmatpush1.msra.mxu0 0.0
      %1418 = vmatprep.subr.mxu0 0.0
      %1419 = vmatpush1.msra.mxu0 0.0
      %1420 = vmatprep.subr.mxu0 0.0
      %1421 = vmatpush1.msra.mxu0 0.0
      %1422 = vmatprep.subr.mxu0 0.0
      %1423 = vmatpush1.msra.mxu0 0.0
      %1424 = vmatprep.subr.mxu0 0.0
      %1425 = vmatpush1.msra.mxu0 0.0
      %1426 = vmatprep.subr.mxu0 0.0
      %1427 = vmatpush1.msra.mxu0 0.0
      %1428 = vmatprep.subr.mxu0 0.0
      %1429 = vmatpush1.msra.mxu0 0.0
      %1430 = vmatprep.subr.mxu0 0.0
      %1431 = vmatpush1.msra.mxu0 0.0
      %1432 = vmatprep.subr.mxu0 0.0
      %1433 = vmatpush1.msra.mxu0 0.0
      %1434 = vmatprep.subr.mxu0 0.0
      %1435 = vmatpush1.msra.mxu0 0.0
      %1436 = vmatprep.subr.mxu0 0.0
      %1437 = vmatpush1.msra.mxu0 0.0
      %1438 = vmatprep.subr.mxu0 %v1398
      %1439 = vmatpush1.msra.mxu0 %v1397
      %1440 = vmatprep.subr.mxu0 0.0
      %1441 = vmatpush2.msra.mxu0 0.0
      %1442 = vmatprep.subr.mxu0 0.0
      %1443 = vmatpush2.msra.mxu0 0.0
      %1444 = vmatprep.subr.mxu0 0.0
      %1445 = vmatpush2.msra.mxu0 0.0
      %1446 = vmatprep.subr.mxu0 0.0
      %1447 = vmatpush2.msra.mxu0 0.0
      %1448 = vmatprep.subr.mxu0 0.0
      %1449 = vmatpush2.msra.mxu0 0.0
      %1450 = vmatprep.subr.mxu0 0.0
      %1451 = vmatpush2.msra.mxu0 0.0
      %1452 = vmatprep.subr.mxu0 0.0
      %1453 = vmatpush2.msra.mxu0 0.0
      %1454 = vmatprep.subr.mxu0 0.0
      %1455 = vmatpush2.msra.mxu0 0.0
      %1456 = vmatprep.subr.mxu0 0.0
      %1457 = vmatpush2.msra.mxu0 0.0
      %1458 = vmatprep.subr.mxu0 0.0
      %1459 = vmatpush2.msra.mxu0 0.0
      %1460 = vmatprep.subr.mxu0 0.0
      %1461 = vmatpush2.msra.mxu0 0.0
      %1462 = vmatprep.subr.mxu0 0.0
      %1463 = vmatpush2.msra.mxu0 0.0
      %1464 = vmatprep.subr.mxu0 0.0
      %1465 = vmatpush2.msra.mxu0 0.0
      %1466 = vmatprep.subr.mxu0 0.0
      %1467 = vmatpush2.msra.mxu0 0.0
      %1468 = vmatprep.subr.mxu0 0.0
      %1469 = vmatpush2.msra.mxu0 0.0
      %1470 = vmatprep.subr.mxu0 0.0
      %1471 = vmatpush2.msra.mxu0 0.0
      %1472 = vmatprep.mubr.f32.mxu0 0.0
      %1473 = vmatmul.mubr.f32.gmra.mxu0 %v1403
      %v1474 = vpop.f32.mrf.mxu0
      %v1475 = vadd.f32 0.0, %v1474
      %v1476 = vpop.f32.mrf.mxu0
      %v1477 = vadd.f32 0.0, %v1476
      %1478 = vmatprep.mubr.f32.mxu0 0.0
      %1479 = vmatmul.mubr.f32.gmra.mxu0 %v1406
      %v1480 = vpop.f32.mrf.mxu0
      %v1481 = vadd.f32 0.0, %v1480
      %v1482 = vpop.f32.mrf.mxu0
      %v1483 = vadd.f32 0.0, %v1482
      %1484 = vdwg.mxu0
      %v1485 = vadd.f32 %v1373, %v1475
      %v1486 = vadd.f32 %v1374, %v1477
      %v1487 = vadd.f32 %v1375, %v1481
      %v1488 = vadd.f32 %v1376, %v1483
      %v1489 = vmax.f32 %v1485, 0.0
      %v1490 = vmax.f32 %v1486, 0.0
      %v1491 = vmax.f32 %v1487, 0.0
      %v1492 = vmax.f32 %v1488, 0.0
      %1493 = vst [vmem:[%s379] sm:$0xff] %v1489
      %1494 = vst [vmem:[%s379 + $0x8] sm:$0xff] %v1490
      %1495 = vst [vmem:[%s379 + $0x10] sm:$0xff] %v1491
      %1496 = vst [vmem:[%s379 + $0x18] sm:$0xff] %v1492
      %v1497 = vadd.f32 %v1489, %v1490
      %1498 = vadd.xlane.f32.xlu0 %v1497
      %v1499 = vpop.xlane.xlu0 %1498
      %v1500 = vadd.f32 %v1491, %v1492
      %1501 = vadd.xlane.f32.xlu0 %v1500
      %v1502 = vpop.xlane.xlu0 %1501
      %v1503 = vld [vmem:[%s5] sm:$0xff]
      %v1504 = vld [vmem:[%s5 + $0x8] sm:$0xff]
      %v1505 = vld [vmem:[%s5 + $0x10] sm:$0xff]
      %v1506 = vld [vmem:[%s5 + $0x18] sm:$0xff]
      %v1507 = vld [vmem:[%s6] sm:$0xff]
      %v1508 = vld [vmem:[%s6 + $0x8] sm:$0xff]
      %v1509 = vld [vmem:[%s6 + $0x10] sm:$0xff]
      %v1510 = vld [vmem:[%s6 + $0x18] sm:$0xff]
      %vm1511 = vcmask 130048
      %v1513 = vsel %vm1511, %v1503, 0
      %v1516 = vsel %vm1511, %v1504, 0
      %v1519 = vsel %vm1511, %v1505, 0
      %v1522 = vsel %vm1511, %v1506, 0
      %1524 = vmatprep.subr.mxu0 0.0
      %1525 = vmatpush1.msra.mxu0 0.0
      %1526 = vmatprep.subr.mxu0 0.0
      %1527 = vmatpush1.msra.mxu0 0.0
      %1528 = vmatprep.subr.mxu0 0.0
      %1529 = vmatpush1.msra.mxu0 0.0
      %1530 = vmatprep.subr.mxu0 0.0
      %1531 = vmatpush1.msra.mxu0 0.0
      %1532 = vmatprep.subr.mxu0 0.0
      %1533 = vmatpush1.msra.mxu0 0.0
      %1534 = vmatprep.subr.mxu0 0.0
      %1535 = vmatpush1.msra.mxu0 0.0
      %1536 = vmatprep.subr.mxu0 0.0
      %1537 = vmatpush1.msra.mxu0 0.0
      %1538 = vmatprep.subr.mxu0 0.0
      %1539 = vmatpush1.msra.mxu0 0.0
      %1540 = vmatprep.subr.mxu0 0.0
      %1541 = vmatpush1.msra.mxu0 0.0
      %1542 = vmatprep.subr.mxu0 0.0
      %1543 = vmatpush1.msra.mxu0 0.0
      %1544 = vmatprep.subr.mxu0 0.0
      %1545 = vmatpush1.msra.mxu0 0.0
      %1546 = vmatprep.subr.mxu0 0.0
      %1547 = vmatpush1.msra.mxu0 0.0
      %1548 = vmatprep.subr.mxu0 0.0
      %1549 = vmatpush1.msra.mxu0 0.0
      %1550 = vmatprep.subr.mxu0 0.0
      %1551 = vmatpush1.msra.mxu0 0.0
      %1552 = vmatprep.subr.mxu0 0.0
      %1553 = vmatpush1.msra.mxu0 %v1502
      %1554 = vmatprep.subr.mxu0 0.0
      %1555 = vmatpush1.msra.mxu0 %v1499
      %1556 = vmatprep.subr.mxu0 0.0
      %1557 = vmatpush2.msra.mxu0 0.0
      %1558 = vmatprep.subr.mxu0 0.0
      %1559 = vmatpush2.msra.mxu0 0.0
      %1560 = vmatprep.subr.mxu0 0.0
      %1561 = vmatpush2.msra.mxu0 0.0
      %1562 = vmatprep.subr.mxu0 0.0
      %1563 = vmatpush2.msra.mxu0 0.0
      %1564 = vmatprep.subr.mxu0 0.0
      %1565 = vmatpush2.msra.mxu0 0.0
      %1566 = vmatprep.subr.mxu0 0.0
      %1567 = vmatpush2.msra.mxu0 0.0
      %1568 = vmatprep.subr.mxu0 0.0
      %1569 = vmatpush2.msra.mxu0 0.0
      %1570 = vmatprep.subr.mxu0 0.0
      %1571 = vmatpush2.msra.mxu0 0.0
      %1572 = vmatprep.subr.mxu0 0.0
      %1573 = vmatpush2.msra.mxu0 0.0
      %1574 = vmatprep.subr.mxu0 0.0
      %1575 = vmatpush2.msra.mxu0 0.0
      %1576 = vmatprep.subr.mxu0 0.0
      %1577 = vmatpush2.msra.mxu0 0.0
      %1578 = vmatprep.subr.mxu0 0.0
      %1579 = vmatpush2.msra.mxu0 0.0
      %1580 = vmatprep.subr.mxu0 0.0
      %1581 = vmatpush2.msra.mxu0 0.0
      %1582 = vmatprep.subr.mxu0 0.0
      %1583 = vmatpush2.msra.mxu0 0.0
      %1584 = vmatprep.subr.mxu0 0.0
      %1585 = vmatpush2.msra.mxu0 0.0
      %1586 = vmatprep.subr.mxu0 0.0
      %1587 = vmatpush2.msra.mxu0 0.0
      %1588 = vmatprep.mubr.f32.mxu0 0.0
      %1589 = vmatmul.mubr.f32.gmra.mxu0 %v1513
      %v1590 = vpop.f32.mrf.mxu0
      %v1591 = vadd.f32 %v1507, %v1590
      %v1592 = vpop.f32.mrf.mxu0
      %1593 = vmatprep.mubr.f32.mxu0 0.0
      %1594 = vmatmul.mubr.f32.gmra.mxu0 %v1516
      %v1595 = vpop.f32.mrf.mxu0
      %v1596 = vadd.f32 %v1508, %v1595
      %v1597 = vpop.f32.mrf.mxu0
      %1598 = vmatprep.mubr.f32.mxu0 0.0
      %1599 = vmatmul.mubr.f32.gmra.mxu0 %v1519
      %v1600 = vpop.f32.mrf.mxu0
      %v1601 = vadd.f32 %v1509, %v1600
      %v1602 = vpop.f32.mrf.mxu0
      %1603 = vmatprep.mubr.f32.mxu0 0.0
      %1604 = vmatmul.mubr.f32.gmra.mxu0 %v1522
      %v1605 = vpop.f32.mrf.mxu0
      %v1606 = vadd.f32 %v1510, %v1605
      %v1607 = vpop.f32.mrf.mxu0
      %1608 = vdwg.mxu0
      %vm1609 = vcmask 7168
      %1610 = vst.msk [vmem:[%s384] sm:$0xff] %vm1609, %v1591
      %1611 = vst.msk [vmem:[%s384 + $0x8] sm:$0xff] %vm1609, %v1596
      %1612 = vst.msk [vmem:[%s384 + $0x10] sm:$0xff] %vm1609, %v1601
      %1613 = vst.msk [vmem:[%s384 + $0x18] sm:$0xff] %vm1609, %v1606
      %p1614 = scmp.lt.s32.totalorder %s22, 1
      %s1615 = scalar_select %p1614, %s22, 1
      %s1616 = smul.addr %s1615, 2
      %s1617 = smul.addr %s1616, 8
      %s1618 = scalar_lea.vmem %s8, %s1617
      %p1619 = scmp.lt.s32.totalorder %s22, 1
      %s1620 = scalar_select %p1619, %s22, 1
      %s1621 = smul.addr %s1620, 4
      %s1622 = smul.addr %s1621, 8
      %s1623 = scalar_lea.vmem %s9, %s1622
      %p1624 = scmp.lt.s32.totalorder %s22, 1
      %s1625 = scalar_select %p1624, %s22, 1
      %s1626 = smul.addr %s1625, 4
      %s1627 = smul.addr %s1626, 8
      %s1628 = scalar_lea.vmem %s10, %s1627
      // Predicated region
      $region53: #{_fused_forward.1} parent=51 // pred_check
        %p1629 = pneg %p213
      $region54: #{_fused_forward.1} parent=51 // pred_check_branch
        %1631 = sbr.rel (%p1629) target = $region56
      $region55: #{_fused_forward.1} parent=51 // pred_region
        _
      $region56: #{_fused_forward.1} parent=51 // pred_fallthru
        _
      // Predicated region
      $region57: #{_fused_forward.1} parent=51 // pred_check
        %p1632 = pneg %p239
      $region58: #{_fused_forward.1} parent=51 // pred_check_branch
        %1634 = sbr.rel (%p1632) target = $region60
      $region59: #{_fused_forward.1} parent=51 // pred_region
        _
      $region60: #{_fused_forward.1} parent=51 // pred_fallthru
        _
      // Predicated region
      $region61: #{_fused_forward.1} parent=51 // pred_check
        %p1635 = pneg %p265
      $region62: #{_fused_forward.1} parent=51 // pred_check_branch
        %1637 = sbr.rel (%p1635) target = $region64
      $region63: #{_fused_forward.1} parent=51 // pred_region
        _
      $region64: #{_fused_forward.1} parent=51 // pred_fallthru
        _
    $region52: #{_fused_forward.1} parent=5 // pred_fallthru
      _
    %p1638 = scmp.le.s32.totalorder 2, %s17
    // Predicated region
    $region65: #{_fused_forward.1} parent=5 // pred_check
      %p1639 = pneg %p1638
    $region66: #{_fused_forward.1} parent=5 // pred_check_branch
      %1641 = sbr.rel (%p1639) target = $region68
    $region67: #{_fused_forward.1} parent=5 // pred_region
      %s1642 = ssub.s32 %s17, 2
      // Predicated region
      $region69: #{_fused_forward.1} parent=67 // pred_check
        %p1643 = pneg %p219
      $region70: #{_fused_forward.1} parent=67 // pred_check_branch
        %1645 = sbr.rel (%p1643) target = $region72
      $region71: #{_fused_forward.1} parent=67 // pred_region
        %p1646 = scmp.lt.s32.totalorder %s23, 1
        %s1647 = scalar_select %p1646, %s23, 1
        %s1648 = smul.addr %s1647, 2
        %s1649 = smul.addr %s1648, 8
        %s1650 = scalar_lea.vmem %s8, %s1649
      $region72: #{_fused_forward.1} parent=67 // pred_fallthru
        _
      // Predicated region
      $region73: #{_fused_forward.1} parent=67 // pred_check
        %p1651 = pneg %p245
      $region74: #{_fused_forward.1} parent=67 // pred_check_branch
        %1653 = sbr.rel (%p1651) target = $region76
      $region75: #{_fused_forward.1} parent=67 // pred_region
        %p1654 = scmp.lt.s32.totalorder %s23, 1
        %s1655 = scalar_select %p1654, %s23, 1
        %s1656 = smul.addr %s1655, 4
        %s1657 = smul.addr %s1656, 8
        %s1658 = scalar_lea.vmem %s9, %s1657
      $region76: #{_fused_forward.1} parent=67 // pred_fallthru
        _
      // Predicated region
      $region77: #{_fused_forward.1} parent=67 // pred_check
        %p1659 = pneg %p271
      $region78: #{_fused_forward.1} parent=67 // pred_check_branch
        %1661 = sbr.rel (%p1659) target = $region80
      $region79: #{_fused_forward.1} parent=67 // pred_region
        %p1662 = scmp.lt.s32.totalorder %s23, 1
        %s1663 = scalar_select %p1662, %s23, 1
        %s1664 = smul.addr %s1663, 4
        %s1665 = smul.addr %s1664, 8
        %s1666 = scalar_lea.vmem %s10, %s1665
      $region80: #{_fused_forward.1} parent=67 // pred_fallthru
        _
    $region68: #{_fused_forward.1} parent=5 // pred_fallthru
      _
  $region6: #{_fused_forward.1} parent=0 // loop_footer
    %s21 = sadd.s32 1, %s17
  $region7: #{_fused_forward.1} parent=0 // loop_footer_branch
    %16 = sbr.rel target = $region3
  $region8: #{_fused_forward.1} parent=0 // loop_exit
    _

</llo_original>
